<compile_context>
chip_gen: v7x
topology: tpu7x:2x2x1
jax: 0.10.0
libtpu: 0.0.40
codegen_flags: <defaults>
</compile_context>

<pallas_src>
import jax
import jax.numpy as jnp
from jax.experimental import pallas as pl
from jax.experimental.pallas import tpu as pltpu

TACTILE_DIM = 64
VISION_DIM = 512
AUDIO_DIM = 64
INTENT_DIM = 64
FUSED_IN = TACTILE_DIM + VISION_DIM + AUDIO_DIM + INTENT_DIM  # 704
H1 = 256
PARIETAL_DIM = 128
M1 = 64
M2 = 32
MOTOR_DIM = 8
MOTOR_PAD = 128        # lane-dense slab width for the motor output store
MAX_TILE_B = 1024      # safe everywhere with the 40 MiB scoped-VMEM limit below
SMALL_B = 256          # at/below this batch, a single grid step is used
VMEM_LIMIT_BYTES = 40 * 1024 * 1024


def _controller_kernel(tac_ref, vis_ref, aud_ref, int_ref,
                       w1t_ref, w1v_ref, w1a_ref, w1i_ref, b1_ref,
                       w2_ref, b2_ref,
                       w3_ref, b3_ref,
                       w4_ref, b4_ref,
                       w5_ref, b5_ref,
                       parietal_ref, motor_ref):
    f32 = jnp.float32
    bf16 = jnp.bfloat16

    # --- fusion_layer: Linear(704,256) as split-K over the four modalities ---
    h1 = jnp.dot(tac_ref[...].astype(bf16), w1t_ref[...], preferred_element_type=f32)
    h1 = h1 + jnp.dot(vis_ref[...].astype(bf16), w1v_ref[...], preferred_element_type=f32)
    h1 = h1 + jnp.dot(aud_ref[...].astype(bf16), w1a_ref[...], preferred_element_type=f32)
    h1 = h1 + jnp.dot(int_ref[...].astype(bf16), w1i_ref[...], preferred_element_type=f32)
    h1 = jnp.maximum(h1 + b1_ref[...], 0.0)
    # TODO(synk): Dropout(0.2) is identity at inference; no RNG masking applied.

    # Linear(256,128) -> Tanh  (parietal output, kept in f32: module output)
    p = jnp.dot(h1.astype(bf16), w2_ref[...], preferred_element_type=f32) + b2_ref[...]
    p = jnp.tanh(p)
    parietal_ref[...] = p.astype(parietal_ref.dtype)

    # --- motor_head: Linear->ReLU->Linear->ReLU->Linear (output padded to 128) ---
    m = jnp.dot(p.astype(bf16), w3_ref[...], preferred_element_type=f32) + b3_ref[...]
    m = jnp.maximum(m, 0.0)
    m = jnp.dot(m.astype(bf16), w4_ref[...], preferred_element_type=f32) + b4_ref[...]
    m = jnp.maximum(m, 0.0)
    # w5/b5 are zero-padded (32,128)/(1,128) -> lane-dense final store (bf16 slab).
    m = jnp.dot(m.astype(bf16), w5_ref[...], preferred_element_type=f32) + b5_ref[...]
    motor_ref[...] = m.astype(motor_ref.dtype)


def _pick_tile_b(B):
    """Single step for small B; otherwise >= 2 grid steps (feeds both v7x TCs)."""
    if B <= SMALL_B:
        return B
    half = (B + 1) // 2
    tb = ((half + 7) // 8) * 8          # multiple of 8 (sublane constraint)
    return min(MAX_TILE_B, tb)


def robotics_controller_forward(vision, audio, tactile, intent, params):
    """Mirrors RoboticsController.forward. Returns dict with parietal/motor outputs."""
    B = vision.shape[0]
    tb = _pick_tile_b(B)
    grid = (pl.cdiv(B, tb),)            # last block may be partial; writes are masked

    def act_spec(feat):
        return pl.BlockSpec((tb, feat), lambda i: (i, 0))

    def resident(arr):
        # Weights/biases: same block every grid step -> stays VMEM-resident.
        return pl.BlockSpec(arr.shape, lambda i: (0, 0))

    in_specs = [
        act_spec(TACTILE_DIM), act_spec(VISION_DIM),
        act_spec(AUDIO_DIM), act_spec(INTENT_DIM),
        resident(params["w1_tac"]), resident(params["w1_vis"]),
        resident(params["w1_aud"]), resident(params["w1_int"]),
        resident(params["b1"]),
        resident(params["w2"]), resident(params["b2"]),
        resident(params["w3"]), resident(params["b3"]),
        resident(params["w4"]), resident(params["b4"]),
        resident(params["w5"]), resident(params["b5"]),
    ]
    out_specs = [
        pl.BlockSpec((tb, PARIETAL_DIM), lambda i: (i, 0)),
        pl.BlockSpec((tb, MOTOR_PAD), lambda i: (i, 0)),
    ]

    flops = 2 * B * (FUSED_IN * H1 + H1 * PARIETAL_DIM
                     + PARIETAL_DIM * M1 + M1 * M2 + M2 * MOTOR_PAD)
    weight_bytes = sum(int(v.size) * v.dtype.itemsize for v in params.values())
    bytes_accessed = (B * FUSED_IN * 4
                      + weight_bytes
                      + B * (PARIETAL_DIM * 4 + MOTOR_PAD * 2))

    parietal, motor_slab = pl.pallas_call(
        _controller_kernel,
        out_shape=(jax.ShapeDtypeStruct((B, PARIETAL_DIM), jnp.float32),
                   jax.ShapeDtypeStruct((B, MOTOR_PAD), jnp.bfloat16)),
        grid_spec=pltpu.PrefetchScalarGridSpec(
            num_scalar_prefetch=0,
            grid=grid,
            in_specs=in_specs,
            out_specs=out_specs),
        compiler_params=pltpu.CompilerParams(
            dimension_semantics=("parallel",),
            vmem_limit_bytes=VMEM_LIMIT_BYTES),
        cost_estimate=pl.CostEstimate(
            flops=flops,
            transcendentals=B * PARIETAL_DIM,
            bytes_accessed=bytes_accessed),
    )(tactile, vision, audio, intent,
      params["w1_tac"], params["w1_vis"], params["w1_aud"], params["w1_int"],
      params["b1"],
      params["w2"], params["b2"],
      params["w3"], params["b3"],
      params["w4"], params["b4"],
      params["w5"], params["b5"])

    motor_command = motor_slab[:, :MOTOR_DIM].astype(jnp.float32)
    return {"parietal_output": parietal, "motor_command": motor_command}


def init_params(key):
    """Deterministic synthetic params. Weights as (in,out) = PyTorch W.T, bf16."""
    def linear(k, fan_in, fan_out, pad_out=None):
        kw, kb = jax.random.split(k)
        # PyTorch nn.Linear default init: U(-1/sqrt(fan_in), 1/sqrt(fan_in))
        bound = 1.0 / jnp.sqrt(jnp.float32(fan_in))
        w = jax.random.uniform(kw, (fan_in, fan_out), jnp.float32, -bound, bound)
        b = jax.random.uniform(kb, (1, fan_out), jnp.float32, -bound, bound)
        if pad_out is not None and pad_out > fan_out:
            w = jnp.pad(w, ((0, 0), (0, pad_out - fan_out)))
            b = jnp.pad(b, ((0, 0), (0, pad_out - fan_out)))
        return w.astype(jnp.bfloat16), b

    keys = jax.random.split(key, 9)
    # Layer-1 splits use the full concatenated fan_in (704) for the init bound.
    bound1 = 1.0 / jnp.sqrt(jnp.float32(FUSED_IN))

    def uw(k, shape):
        return jax.random.uniform(k, shape, jnp.float32, -bound1, bound1).astype(jnp.bfloat16)

    w1_tac = uw(keys[0], (TACTILE_DIM, H1))
    w1_vis = uw(keys[1], (VISION_DIM, H1))
    w1_aud = uw(keys[2], (AUDIO_DIM, H1))
    w1_int = uw(keys[3], (INTENT_DIM, H1))
    b1 = jax.random.uniform(keys[4], (1, H1), jnp.float32, -bound1, bound1)
    w2, b2 = linear(keys[5], H1, PARIETAL_DIM)
    w3, b3 = linear(keys[6], PARIETAL_DIM, M1)
    w4, b4 = linear(keys[7], M1, M2)
    w5, b5 = linear(keys[8], M2, MOTOR_DIM, pad_out=MOTOR_PAD)
    return {"w1_tac": w1_tac, "w1_vis": w1_vis, "w1_aud": w1_aud, "w1_int": w1_int,
            "b1": b1, "w2": w2, "b2": b2, "w3": w3, "b3": b3,
            "w4": w4, "b4": b4, "w5": w5, "b5": b5}


def _reference_forward(vision, audio, tactile, intent, params):
    """Pure-JAX reference with the same bf16-weight math as the kernel."""
    bf = jnp.bfloat16
    f32 = jnp.float32
    x = jnp.concatenate([tactile, vision, audio, intent], axis=-1).astype(bf)
    w1 = jnp.concatenate([params["w1_tac"], params["w1_vis"],
                          params["w1_aud"], params["w1_int"]], axis=0)
    h1 = jnp.maximum(jnp.dot(x, w1, preferred_element_type=f32) + params["b1"], 0.0)
    p = jnp.tanh(jnp.dot(h1.astype(bf), params["w2"],
                         preferred_element_type=f32) + params["b2"])
    m = jnp.maximum(jnp.dot(p.astype(bf), params["w3"],
                            preferred_element_type=f32) + params["b3"], 0.0)
    m = jnp.maximum(jnp.dot(m.astype(bf), params["w4"],
                            preferred_element_type=f32) + params["b4"], 0.0)
    m = jnp.dot(m.astype(bf), params["w5"], preferred_element_type=f32) + params["b5"]
    return p, m[:, :MOTOR_DIM]


if __name__ == "__main__":
    key = jax.random.PRNGKey(0)
    kp, kv, ka, kt, ki = jax.random.split(key, 5)

    B = 2
    params = init_params(kp)
    oni_vision_features = jax.random.normal(kv, (B, VISION_DIM), jnp.float32)
    oni_audio_features = jax.random.normal(ka, (B, AUDIO_DIM), jnp.float32)
    oni_tactile_features = jax.random.normal(kt, (B, TACTILE_DIM), jnp.float32)
    intent_vector = jax.random.normal(ki, (B, INTENT_DIM), jnp.float32)

    out = robotics_controller_forward(
        oni_vision_features, oni_audio_features, oni_tactile_features,
        intent_vector, params)
    jax.block_until_ready(out)

    assert out["parietal_output"].shape == (B, PARIETAL_DIM)
    assert out["motor_command"].shape == (B, MOTOR_DIM)
    assert out["parietal_output"].dtype == jnp.float32
    assert out["motor_command"].dtype == jnp.float32

    ref_p, ref_m = _reference_forward(
        oni_vision_features, oni_audio_features, oni_tactile_features,
        intent_vector, params)
    assert jnp.all(jnp.isfinite(out["parietal_output"]))
    assert jnp.all(jnp.isfinite(out["motor_command"]))
    assert jnp.allclose(out["parietal_output"], ref_p, atol=5e-2, rtol=5e-2)
    assert jnp.allclose(out["motor_command"], ref_m, atol=5e-2, rtol=5e-2)

    print("KERNEL_OK")
</pallas_src>

<mosaic_0001>
module attributes {stable_mosaic.version = 11 : i64} {
  func.func @_controller_kernel(%arg0: i32, %arg1: memref<2x64xf32, #tpu.memory_space<vmem>>, %arg2: memref<2x512xf32, #tpu.memory_space<vmem>>, %arg3: memref<2x64xf32, #tpu.memory_space<vmem>>, %arg4: memref<2x64xf32, #tpu.memory_space<vmem>>, %arg5: memref<64x256xbf16, #tpu.memory_space<vmem>>, %arg6: memref<512x256xbf16, #tpu.memory_space<vmem>>, %arg7: memref<64x256xbf16, #tpu.memory_space<vmem>>, %arg8: memref<64x256xbf16, #tpu.memory_space<vmem>>, %arg9: memref<1x256xf32, #tpu.memory_space<vmem>>, %arg10: memref<256x128xbf16, #tpu.memory_space<vmem>>, %arg11: memref<1x128xf32, #tpu.memory_space<vmem>>, %arg12: memref<128x64xbf16, #tpu.memory_space<vmem>>, %arg13: memref<1x64xf32, #tpu.memory_space<vmem>>, %arg14: memref<64x32xbf16, #tpu.memory_space<vmem>>, %arg15: memref<1x32xf32, #tpu.memory_space<vmem>>, %arg16: memref<32x128xbf16, #tpu.memory_space<vmem>>, %arg17: memref<1x128xf32, #tpu.memory_space<vmem>>, %arg18: memref<2x128xf32, #tpu.memory_space<vmem>>, %arg19: memref<2x128xbf16, #tpu.memory_space<vmem>>) attributes {dimension_semantics = [#tpu.dimension_semantics<parallel>], iteration_bounds = array<i64: 1>, scalar_prefetch = 0 : i64, scratch_operands = 0 : i64, tpu.core_type = #tpu.core_type<tc>, window_params = [{transform_indices = @transform_0, window_bounds = array<i64: 2, 64>}, {transform_indices = @transform_1, window_bounds = array<i64: 2, 512>}, {transform_indices = @transform_2, window_bounds = array<i64: 2, 64>}, {transform_indices = @transform_3, window_bounds = array<i64: 2, 64>}, {pipeline_mode = #tpu.pipeline_mode<synchronous>, transform_indices = @transform_4, window_bounds = array<i64: 64, 256>}, {pipeline_mode = #tpu.pipeline_mode<synchronous>, transform_indices = @transform_5, window_bounds = array<i64: 512, 256>}, {pipeline_mode = #tpu.pipeline_mode<synchronous>, transform_indices = @transform_6, window_bounds = array<i64: 64, 256>}, {pipeline_mode = #tpu.pipeline_mode<synchronous>, transform_indices = @transform_7, window_bounds = array<i64: 64, 256>}, {pipeline_mode = #tpu.pipeline_mode<synchronous>, transform_indices = @transform_8, window_bounds = array<i64: 1, 256>}, {pipeline_mode = #tpu.pipeline_mode<synchronous>, transform_indices = @transform_9, window_bounds = array<i64: 256, 128>}, {pipeline_mode = #tpu.pipeline_mode<synchronous>, transform_indices = @transform_10, window_bounds = array<i64: 1, 128>}, {pipeline_mode = #tpu.pipeline_mode<synchronous>, transform_indices = @transform_11, window_bounds = array<i64: 128, 64>}, {pipeline_mode = #tpu.pipeline_mode<synchronous>, transform_indices = @transform_12, window_bounds = array<i64: 1, 64>}, {pipeline_mode = #tpu.pipeline_mode<synchronous>, transform_indices = @transform_13, window_bounds = array<i64: 64, 32>}, {pipeline_mode = #tpu.pipeline_mode<synchronous>, transform_indices = @transform_14, window_bounds = array<i64: 1, 32>}, {pipeline_mode = #tpu.pipeline_mode<synchronous>, transform_indices = @transform_15, window_bounds = array<i64: 32, 128>}, {pipeline_mode = #tpu.pipeline_mode<synchronous>, transform_indices = @transform_16, window_bounds = array<i64: 1, 128>}, {transform_indices = @transform_17, window_bounds = array<i64: 2, 128>}, {transform_indices = @transform_18, window_bounds = array<i64: 2, 128>}]} {
    %c0 = arith.constant 0 : index
    %c0_0 = arith.constant 0 : index
    %0 = vector.load %arg1[%c0, %c0_0] : memref<2x64xf32, #tpu.memory_space<vmem>>, vector<2x64xf32>
    %1 = arith.truncf %0 : vector<2x64xf32> to vector<2x64xbf16>
    %c0_1 = arith.constant 0 : index
    %c0_2 = arith.constant 0 : index
    %2 = vector.load %arg5[%c0_1, %c0_2] : memref<64x256xbf16, #tpu.memory_space<vmem>>, vector<64x256xbf16>
    %cst = arith.constant dense<0.000000e+00> : vector<2x256xf32>
    %3 = tpu.matmul %1, %2, %cst {dimension_numbers = #tpu.dot_dimension_numbers<[1], [0], [0], [1], [0, 0, 1, 1], [], []>} : vector<2x64xbf16>, vector<64x256xbf16>, vector<2x256xf32> -> vector<2x256xf32>
    %c0_3 = arith.constant 0 : index
    %c0_4 = arith.constant 0 : index
    %4 = vector.load %arg2[%c0_3, %c0_4] : memref<2x512xf32, #tpu.memory_space<vmem>>, vector<2x512xf32>
    %5 = arith.truncf %4 : vector<2x512xf32> to vector<2x512xbf16>
    %c0_5 = arith.constant 0 : index
    %c0_6 = arith.constant 0 : index
    %6 = vector.load %arg6[%c0_5, %c0_6] : memref<512x256xbf16, #tpu.memory_space<vmem>>, vector<512x256xbf16>
    %cst_7 = arith.constant dense<0.000000e+00> : vector<2x256xf32>
    %7 = tpu.matmul %5, %6, %cst_7 {dimension_numbers = #tpu.dot_dimension_numbers<[1], [0], [0], [1], [0, 0, 1, 1], [], []>} : vector<2x512xbf16>, vector<512x256xbf16>, vector<2x256xf32> -> vector<2x256xf32>
    %8 = arith.addf %3, %7 : vector<2x256xf32>
    %c0_8 = arith.constant 0 : index
    %c0_9 = arith.constant 0 : index
    %9 = vector.load %arg3[%c0_8, %c0_9] : memref<2x64xf32, #tpu.memory_space<vmem>>, vector<2x64xf32>
    %10 = arith.truncf %9 : vector<2x64xf32> to vector<2x64xbf16>
    %c0_10 = arith.constant 0 : index
    %c0_11 = arith.constant 0 : index
    %11 = vector.load %arg7[%c0_10, %c0_11] : memref<64x256xbf16, #tpu.memory_space<vmem>>, vector<64x256xbf16>
    %cst_12 = arith.constant dense<0.000000e+00> : vector<2x256xf32>
    %12 = tpu.matmul %10, %11, %cst_12 {dimension_numbers = #tpu.dot_dimension_numbers<[1], [0], [0], [1], [0, 0, 1, 1], [], []>} : vector<2x64xbf16>, vector<64x256xbf16>, vector<2x256xf32> -> vector<2x256xf32>
    %13 = arith.addf %8, %12 : vector<2x256xf32>
    %c0_13 = arith.constant 0 : index
    %c0_14 = arith.constant 0 : index
    %14 = vector.load %arg4[%c0_13, %c0_14] : memref<2x64xf32, #tpu.memory_space<vmem>>, vector<2x64xf32>
    %15 = arith.truncf %14 : vector<2x64xf32> to vector<2x64xbf16>
    %c0_15 = arith.constant 0 : index
    %c0_16 = arith.constant 0 : index
    %16 = vector.load %arg8[%c0_15, %c0_16] : memref<64x256xbf16, #tpu.memory_space<vmem>>, vector<64x256xbf16>
    %cst_17 = arith.constant dense<0.000000e+00> : vector<2x256xf32>
    %17 = tpu.matmul %15, %16, %cst_17 {dimension_numbers = #tpu.dot_dimension_numbers<[1], [0], [0], [1], [0, 0, 1, 1], [], []>} : vector<2x64xbf16>, vector<64x256xbf16>, vector<2x256xf32> -> vector<2x256xf32>
    %18 = arith.addf %13, %17 : vector<2x256xf32>
    %c0_18 = arith.constant 0 : index
    %c0_19 = arith.constant 0 : index
    %19 = vector.load %arg9[%c0_18, %c0_19] : memref<1x256xf32, #tpu.memory_space<vmem>>, vector<1x256xf32>
    %20 = vector.broadcast %19 : vector<1x256xf32> to vector<2x256xf32>
    %21 = arith.addf %18, %20 : vector<2x256xf32>
    %cst_20 = arith.constant 0.000000e+00 : f32
    %22 = vector.broadcast %cst_20 : f32 to vector<2x256xf32>
    %23 = arith.maximumf %21, %22 : vector<2x256xf32>
    %24 = arith.truncf %23 : vector<2x256xf32> to vector<2x256xbf16>
    %c0_21 = arith.constant 0 : index
    %c0_22 = arith.constant 0 : index
    %25 = vector.load %arg10[%c0_21, %c0_22] : memref<256x128xbf16, #tpu.memory_space<vmem>>, vector<256x128xbf16>
    %cst_23 = arith.constant dense<0.000000e+00> : vector<2x128xf32>
    %26 = tpu.matmul %24, %25, %cst_23 {dimension_numbers = #tpu.dot_dimension_numbers<[1], [0], [0], [1], [0, 0, 1, 1], [], []>} : vector<2x256xbf16>, vector<256x128xbf16>, vector<2x128xf32> -> vector<2x128xf32>
    %c0_24 = arith.constant 0 : index
    %c0_25 = arith.constant 0 : index
    %27 = vector.load %arg11[%c0_24, %c0_25] : memref<1x128xf32, #tpu.memory_space<vmem>>, vector<1x128xf32>
    %28 = vector.broadcast %27 : vector<1x128xf32> to vector<2x128xf32>
    %29 = arith.addf %26, %28 : vector<2x128xf32>
    %30 = math.tanh %29 : vector<2x128xf32>
    %c0_26 = arith.constant 0 : index
    %c0_27 = arith.constant 0 : index
    %31 = vector.load %arg18[%c0_26, %c0_27] : memref<2x128xf32, #tpu.memory_space<vmem>>, vector<2x128xf32>
    tpu.vector_store %arg18[%c0_26, %c0_27], %30 {strides = array<i32>} : memref<2x128xf32, #tpu.memory_space<vmem>>, vector<2x128xf32>,
    %32 = arith.truncf %30 : vector<2x128xf32> to vector<2x128xbf16>
    %c0_28 = arith.constant 0 : index
    %c0_29 = arith.constant 0 : index
    %33 = vector.load %arg12[%c0_28, %c0_29] : memref<128x64xbf16, #tpu.memory_space<vmem>>, vector<128x64xbf16>
    %cst_30 = arith.constant dense<0.000000e+00> : vector<2x64xf32>
    %34 = tpu.matmul %32, %33, %cst_30 {dimension_numbers = #tpu.dot_dimension_numbers<[1], [0], [0], [1], [0, 0, 1, 1], [], []>} : vector<2x128xbf16>, vector<128x64xbf16>, vector<2x64xf32> -> vector<2x64xf32>
    %c0_31 = arith.constant 0 : index
    %c0_32 = arith.constant 0 : index
    %35 = vector.load %arg13[%c0_31, %c0_32] : memref<1x64xf32, #tpu.memory_space<vmem>>, vector<1x64xf32>
    %36 = vector.broadcast %35 : vector<1x64xf32> to vector<2x64xf32>
    %37 = arith.addf %34, %36 : vector<2x64xf32>
    %cst_33 = arith.constant 0.000000e+00 : f32
    %38 = vector.broadcast %cst_33 : f32 to vector<2x64xf32>
    %39 = arith.maximumf %37, %38 : vector<2x64xf32>
    %40 = arith.truncf %39 : vector<2x64xf32> to vector<2x64xbf16>
    %c0_34 = arith.constant 0 : index
    %c0_35 = arith.constant 0 : index
    %41 = vector.load %arg14[%c0_34, %c0_35] : memref<64x32xbf16, #tpu.memory_space<vmem>>, vector<64x32xbf16>
    %cst_36 = arith.constant dense<0.000000e+00> : vector<2x32xf32>
    %42 = tpu.matmul %40, %41, %cst_36 {dimension_numbers = #tpu.dot_dimension_numbers<[1], [0], [0], [1], [0, 0, 1, 1], [], []>} : vector<2x64xbf16>, vector<64x32xbf16>, vector<2x32xf32> -> vector<2x32xf32>
    %c0_37 = arith.constant 0 : index
    %c0_38 = arith.constant 0 : index
    %43 = vector.load %arg15[%c0_37, %c0_38] : memref<1x32xf32, #tpu.memory_space<vmem>>, vector<1x32xf32>
    %44 = vector.broadcast %43 : vector<1x32xf32> to vector<2x32xf32>
    %45 = arith.addf %42, %44 : vector<2x32xf32>
    %cst_39 = arith.constant 0.000000e+00 : f32
    %46 = vector.broadcast %cst_39 : f32 to vector<2x32xf32>
    %47 = arith.maximumf %45, %46 : vector<2x32xf32>
    %48 = arith.truncf %47 : vector<2x32xf32> to vector<2x32xbf16>
    %c0_40 = arith.constant 0 : index
    %c0_41 = arith.constant 0 : index
    %49 = vector.load %arg16[%c0_40, %c0_41] : memref<32x128xbf16, #tpu.memory_space<vmem>>, vector<32x128xbf16>
    %cst_42 = arith.constant dense<0.000000e+00> : vector<2x128xf32>
    %50 = tpu.matmul %48, %49, %cst_42 {dimension_numbers = #tpu.dot_dimension_numbers<[1], [0], [0], [1], [0, 0, 1, 1], [], []>} : vector<2x32xbf16>, vector<32x128xbf16>, vector<2x128xf32> -> vector<2x128xf32>
    %c0_43 = arith.constant 0 : index
    %c0_44 = arith.constant 0 : index
    %51 = vector.load %arg17[%c0_43, %c0_44] : memref<1x128xf32, #tpu.memory_space<vmem>>, vector<1x128xf32>
    %52 = vector.broadcast %51 : vector<1x128xf32> to vector<2x128xf32>
    %53 = arith.addf %50, %52 : vector<2x128xf32>
    %54 = arith.truncf %53 : vector<2x128xf32> to vector<2x128xbf16>
    %c0_45 = arith.constant 0 : index
    %c0_46 = arith.constant 0 : index
    %55 = vector.load %arg19[%c0_45, %c0_46] : memref<2x128xbf16, #tpu.memory_space<vmem>>, vector<2x128xbf16>
    tpu.vector_store %arg19[%c0_45, %c0_46], %54 {strides = array<i32>} : memref<2x128xbf16, #tpu.memory_space<vmem>>, vector<2x128xbf16>,
    return
  }
  func.func @transform_0(%arg0: i32) -> (i32, i32) {
    %c0_i32 = arith.constant 0 : i32
    %c0_i32_0 = arith.constant 0 : i32
    return %arg0, %c0_i32 : i32, i32
  }
  func.func @transform_1(%arg0: i32) -> (i32, i32) {
    %c0_i32 = arith.constant 0 : i32
    %c0_i32_0 = arith.constant 0 : i32
    return %arg0, %c0_i32 : i32, i32
  }
  func.func @transform_2(%arg0: i32) -> (i32, i32) {
    %c0_i32 = arith.constant 0 : i32
    %c0_i32_0 = arith.constant 0 : i32
    return %arg0, %c0_i32 : i32, i32
  }
  func.func @transform_3(%arg0: i32) -> (i32, i32) {
    %c0_i32 = arith.constant 0 : i32
    %c0_i32_0 = arith.constant 0 : i32
    return %arg0, %c0_i32 : i32, i32
  }
  func.func @transform_4(%arg0: i32) -> (i32, i32) {
    %c0_i32 = arith.constant 0 : i32
    %c0_i32_0 = arith.constant 0 : i32
    %c0_i32_1 = arith.constant 0 : i32
    return %c0_i32, %c0_i32_0 : i32, i32
  }
  func.func @transform_5(%arg0: i32) -> (i32, i32) {
    %c0_i32 = arith.constant 0 : i32
    %c0_i32_0 = arith.constant 0 : i32
    %c0_i32_1 = arith.constant 0 : i32
    return %c0_i32, %c0_i32_0 : i32, i32
  }
  func.func @transform_6(%arg0: i32) -> (i32, i32) {
    %c0_i32 = arith.constant 0 : i32
    %c0_i32_0 = arith.constant 0 : i32
    %c0_i32_1 = arith.constant 0 : i32
    return %c0_i32, %c0_i32_0 : i32, i32
  }
  func.func @transform_7(%arg0: i32) -> (i32, i32) {
    %c0_i32 = arith.constant 0 : i32
    %c0_i32_0 = arith.constant 0 : i32
    %c0_i32_1 = arith.constant 0 : i32
    return %c0_i32, %c0_i32_0 : i32, i32
  }
  func.func @transform_8(%arg0: i32) -> (i32, i32) {
    %c0_i32 = arith.constant 0 : i32
    %c0_i32_0 = arith.constant 0 : i32
    %c0_i32_1 = arith.constant 0 : i32
    return %c0_i32, %c0_i32_0 : i32, i32
  }
  func.func @transform_9(%arg0: i32) -> (i32, i32) {
    %c0_i32 = arith.constant 0 : i32
    %c0_i32_0 = arith.constant 0 : i32
    %c0_i32_1 = arith.constant 0 : i32
    return %c0_i32, %c0_i32_0 : i32, i32
  }
  func.func @transform_10(%arg0: i32) -> (i32, i32) {
    %c0_i32 = arith.constant 0 : i32
    %c0_i32_0 = arith.constant 0 : i32
    %c0_i32_1 = arith.constant 0 : i32
    return %c0_i32, %c0_i32_0 : i32, i32
  }
  func.func @transform_11(%arg0: i32) -> (i32, i32) {
    %c0_i32 = arith.constant 0 : i32
    %c0_i32_0 = arith.constant 0 : i32
    %c0_i32_1 = arith.constant 0 : i32
    return %c0_i32, %c0_i32_0 : i32, i32
  }
  func.func @transform_12(%arg0: i32) -> (i32, i32) {
    %c0_i32 = arith.constant 0 : i32
    %c0_i32_0 = arith.constant 0 : i32
    %c0_i32_1 = arith.constant 0 : i32
    return %c0_i32, %c0_i32_0 : i32, i32
  }
  func.func @transform_13(%arg0: i32) -> (i32, i32) {
    %c0_i32 = arith.constant 0 : i32
    %c0_i32_0 = arith.constant 0 : i32
    %c0_i32_1 = arith.constant 0 : i32
    return %c0_i32, %c0_i32_0 : i32, i32
  }
  func.func @transform_14(%arg0: i32) -> (i32, i32) {
    %c0_i32 = arith.constant 0 : i32
    %c0_i32_0 = arith.constant 0 : i32
    %c0_i32_1 = arith.constant 0 : i32
    return %c0_i32, %c0_i32_0 : i32, i32
  }
  func.func @transform_15(%arg0: i32) -> (i32, i32) {
    %c0_i32 = arith.constant 0 : i32
    %c0_i32_0 = arith.constant 0 : i32
    %c0_i32_1 = arith.constant 0 : i32
    return %c0_i32, %c0_i32_0 : i32, i32
  }
  func.func @transform_16(%arg0: i32) -> (i32, i32) {
    %c0_i32 = arith.constant 0 : i32
    %c0_i32_0 = arith.constant 0 : i32
    %c0_i32_1 = arith.constant 0 : i32
    return %c0_i32, %c0_i32_0 : i32, i32
  }
  func.func @transform_17(%arg0: i32) -> (i32, i32) {
    %c0_i32 = arith.constant 0 : i32
    %c0_i32_0 = arith.constant 0 : i32
    return %arg0, %c0_i32 : i32, i32
  }
  func.func @transform_18(%arg0: i32) -> (i32, i32) {
    %c0_i32 = arith.constant 0 : i32
    %c0_i32_0 = arith.constant 0 : i32
    return %arg0, %c0_i32 : i32, i32
  }
}

</mosaic_0001>

<llo_original>
// kernel: tpu_custom_call.1
$region0: #{tpu_custom_call.1}
  #allocation0 [shape = 'u32[]', space=smem, size = 0x4, offset = 0x4, fixed_abs, tag = 'smem constant byte address 0x4 - core index']
  #allocation1 [shape = 'u32[144,128]{1,0:T(1,128)}', space=vmem, size = 0x12000, scoped, tag = 'internal scratch']
  %s0 = inlined_call_operand.hbm [shape: f32[2,64], index: 0, kind: input, shape index: {}]
  %s1 = inlined_call_operand.hbm [shape: f32[2,512], index: 1, kind: input, shape index: {}]
  %s2 = inlined_call_operand.hbm [shape: f32[2,64], index: 2, kind: input, shape index: {}]
  %s3 = inlined_call_operand.hbm [shape: f32[2,64], index: 3, kind: input, shape index: {}]
  %s4 = inlined_call_operand.hbm [shape: bf16[64,256], index: 4, kind: input, shape index: {}]
  %s5 = inlined_call_operand.hbm [shape: bf16[512,256], index: 5, kind: input, shape index: {}]
  %s6 = inlined_call_operand.hbm [shape: bf16[64,256], index: 6, kind: input, shape index: {}]
  %s7 = inlined_call_operand.hbm [shape: bf16[64,256], index: 7, kind: input, shape index: {}]
  %s8 = inlined_call_operand.hbm [shape: f32[1,256], index: 8, kind: input, shape index: {}]
  %s9 = inlined_call_operand.vmem [shape: bf16[256,128], index: 9, kind: input, shape index: {}]
  %s10 = inlined_call_operand.vmem [shape: f32[1,128], index: 10, kind: input, shape index: {}]
  %s11 = inlined_call_operand.vmem [shape: bf16[128,64], index: 11, kind: input, shape index: {}]
  %s12 = inlined_call_operand.hbm [shape: f32[1,64], index: 12, kind: input, shape index: {}]
  %s13 = inlined_call_operand.vmem [shape: bf16[64,32], index: 13, kind: input, shape index: {}]
  %s14 = inlined_call_operand.vmem [shape: f32[1,32], index: 14, kind: input, shape index: {}]
  %s15 = inlined_call_operand.vmem [shape: bf16[32,128], index: 15, kind: input, shape index: {}]
  %s16 = inlined_call_operand.vmem [shape: f32[1,128], index: 16, kind: input, shape index: {}]
  %s17 = inlined_call_operand.hbm [shape: f32[2,128], index: 17, kind: output, shape index: {0}]
  %s18 = inlined_call_operand.hbm [shape: bf16[2,128], index: 18, kind: output, shape index: {1}]
  %19 = xla_tuple %s17, %s18
  %s20 = sld [smem:[#allocation0]]
  $region126: #{tpu_custom_call.1} parent=0
    _
  %s22 = ssub.s32 1, %s20
  %s23 = scalar_select 0, %s22, %s20
  $region1: #{tpu_custom_call.1} parent=0
    #allocation2 [shape = 'u8[1024]{0}', space=vmem, size = 0x400, scoped, tag = 'input window, operand 0, single buffered']
    #allocation3 [shape = 's32[1]{0}', space=sflag, size = 0x4, scoped, tag = 'scoped memory for tpu_custom_call.1']
    #allocation4 [shape = 's32[1]{0}', space=sflag, size = 0x4, scoped, tag = 'scoped memory for tpu_custom_call.1']
    #allocation5 [shape = 'u8[4096]{0}', space=vmem, size = 0x1000, scoped, tag = 'input window, operand 1, single buffered']
    #allocation6 [shape = 's32[1]{0}', space=sflag, size = 0x4, scoped, tag = 'scoped memory for tpu_custom_call.1']
    #allocation7 [shape = 'u8[1024]{0}', space=vmem, size = 0x400, scoped, tag = 'input window, operand 2, single buffered']
    #allocation8 [shape = 'u8[1024]{0}', space=vmem, size = 0x400, scoped, tag = 'input window, operand 3, single buffered']
    #allocation9 [shape = 's32[1]{0}', space=sflag, size = 0x4, scoped, tag = 'scoped memory for tpu_custom_call.1']
    #allocation10 [shape = 'u8[32768]{0}', space=vmem, size = 0x8000, scoped, tag = 'input window, operand 4, single buffered']
    #allocation11 [shape = 'u8[262144]{0}', space=vmem, size = 0x40000, scoped, tag = 'input window, operand 5, single buffered']
    #allocation12 [shape = 's32[1]{0}', space=sflag, size = 0x4, scoped, tag = 'scoped memory for tpu_custom_call.1']
    #allocation13 [shape = 'u8[32768]{0}', space=vmem, size = 0x8000, scoped, tag = 'input window, operand 6, single buffered']
    #allocation14 [shape = 'u8[32768]{0}', space=vmem, size = 0x8000, scoped, tag = 'input window, operand 7, single buffered']
    #allocation15 [shape = 's32[1]{0}', space=sflag, size = 0x4, scoped, tag = 'scoped memory for tpu_custom_call.1']
    #allocation16 [shape = 'u8[1024]{0}', space=vmem, size = 0x400, scoped, tag = 'input window, operand 8, single buffered']
    #allocation17 [shape = 'u8[512]{0}', space=vmem, size = 0x400, scoped, tag = 'input window, operand 12, single buffered']
    #allocation18 [shape = 's32[1]{0}', space=sflag, size = 0x4, scoped, tag = 'scoped memory for tpu_custom_call.1']
    #allocation19 [shape = 'u8[1024]{0}', space=vmem, size = 0x400, scoped, tag = 'output window, operand 0, single buffered']
    #allocation20 [shape = 'u8[512]{0}', space=vmem, size = 0x400, scoped, tag = 'output window, operand 1, single buffered']
    #allocation21 [shape = 's32[1]{0}', space=sflag, size = 0x4, scoped, tag = 'scoped memory for tpu_custom_call.1']
    %24 = vsyncpa [#allocation3], 0
    %25 = vsyncpa [#allocation6], 0
    %26 = vsyncpa [#allocation9], 0
    %27 = vsyncpa [#allocation12], 0
    %28 = vsyncpa [#allocation15], 0
    %29 = vsyncpa [#allocation18], 0
    %30 = vsyncpa [#allocation4], 0
    %31 = vsyncpa [#allocation21], 0
    // Predicated region
    $region2: #{tpu_custom_call.1} parent=1 // pred_check
      _
    $region3: #{tpu_custom_call.1} parent=1 // pred_check_branch
      %33 = sbr.rel (0) target = $region5
    $region4: #{tpu_custom_call.1} parent=1 // pred_region
      %s35 = ssub.s32 32, 32
      %36 = vsyncadd [#allocation3], %s35
      %s38 = sshll.u32 [#allocation2], 4
      %s39 = int_to_ptr.vmem [resolvable:$true] %s38
      %41 = dma.hbm_to_vmem [thread:$0]  %s0, 32, %s39, [#allocation3]
    $region5: #{tpu_custom_call.1} parent=1 // pred_fallthru
      _
    // Predicated region
    $region6: #{tpu_custom_call.1} parent=1 // pred_check
      _
    $region7: #{tpu_custom_call.1} parent=1 // pred_check_branch
      %43 = sbr.rel (0) target = $region9
    $region8: #{tpu_custom_call.1} parent=1 // pred_region
      %s45 = ssub.s32 128, 128
      %46 = vsyncadd [#allocation6], %s45
      %s48 = sshll.u32 [#allocation5], 4
      %s49 = int_to_ptr.vmem [resolvable:$true] %s48
      %51 = dma.hbm_to_vmem [thread:$0]  %s1, 128, %s49, [#allocation6]
    $region9: #{tpu_custom_call.1} parent=1 // pred_fallthru
      _
    // Predicated region
    $region10: #{tpu_custom_call.1} parent=1 // pred_check
      _
    $region11: #{tpu_custom_call.1} parent=1 // pred_check_branch
      %53 = sbr.rel (0) target = $region13
    $region12: #{tpu_custom_call.1} parent=1 // pred_region
      %s55 = ssub.s32 32, 32
      %56 = vsyncadd [#allocation6], %s55
      %s58 = sshll.u32 [#allocation7], 4
      %s59 = int_to_ptr.vmem [resolvable:$true] %s58
      %61 = dma.hbm_to_vmem [thread:$0]  %s2, 32, %s59, [#allocation6]
    $region13: #{tpu_custom_call.1} parent=1 // pred_fallthru
      _
    // Predicated region
    $region14: #{tpu_custom_call.1} parent=1 // pred_check
      _
    $region15: #{tpu_custom_call.1} parent=1 // pred_check_branch
      %63 = sbr.rel (0) target = $region17
    $region16: #{tpu_custom_call.1} parent=1 // pred_region
      %s65 = ssub.s32 32, 32
      %66 = vsyncadd [#allocation9], %s65
      %s68 = sshll.u32 [#allocation8], 4
      %s69 = int_to_ptr.vmem [resolvable:$true] %s68
      %71 = dma.hbm_to_vmem [thread:$0]  %s3, 32, %s69, [#allocation9]
    $region17: #{tpu_custom_call.1} parent=1 // pred_fallthru
      _
    // Predicated region
    $region18: #{tpu_custom_call.1} parent=1 // pred_check
      _
    $region19: #{tpu_custom_call.1} parent=1 // pred_check_branch
      %73 = sbr.rel (0) target = $region21
    $region20: #{tpu_custom_call.1} parent=1 // pred_region
      %s75 = ssub.s32 1024, 1024
      %76 = vsyncadd [#allocation9], %s75
      %s77 = sshll.u32 [#allocation10], 4
      %s78 = int_to_ptr.vmem [resolvable:$true] %s77
      %83 = dma.hbm_to_vmem [thread:$0]  %s4, 1024, %s78, [#allocation9], 128, 128, 8
    $region21: #{tpu_custom_call.1} parent=1 // pred_fallthru
      _
    // Predicated region
    $region22: #{tpu_custom_call.1} parent=1 // pred_check
      _
    $region23: #{tpu_custom_call.1} parent=1 // pred_check_branch
      %85 = sbr.rel (0) target = $region25
    $region24: #{tpu_custom_call.1} parent=1 // pred_region
      %s87 = ssub.s32 8192, 8192
      %88 = vsyncadd [#allocation12], %s87
      %s89 = sshll.u32 [#allocation11], 4
      %s90 = int_to_ptr.vmem [resolvable:$true] %s89
      %95 = dma.hbm_to_vmem [thread:$0]  %s5, 8192, %s90, [#allocation12], 128, 128, 8
    $region25: #{tpu_custom_call.1} parent=1 // pred_fallthru
      _
    // Predicated region
    $region26: #{tpu_custom_call.1} parent=1 // pred_check
      _
    $region27: #{tpu_custom_call.1} parent=1 // pred_check_branch
      %97 = sbr.rel (0) target = $region29
    $region28: #{tpu_custom_call.1} parent=1 // pred_region
      %s99 = ssub.s32 1024, 1024
      %100 = vsyncadd [#allocation12], %s99
      %s101 = sshll.u32 [#allocation13], 4
      %s102 = int_to_ptr.vmem [resolvable:$true] %s101
      %107 = dma.hbm_to_vmem [thread:$0]  %s6, 1024, %s102, [#allocation12], 128, 128, 8
    $region29: #{tpu_custom_call.1} parent=1 // pred_fallthru
      _
    // Predicated region
    $region30: #{tpu_custom_call.1} parent=1 // pred_check
      _
    $region31: #{tpu_custom_call.1} parent=1 // pred_check_branch
      %109 = sbr.rel (0) target = $region33
    $region32: #{tpu_custom_call.1} parent=1 // pred_region
      %s111 = ssub.s32 1024, 1024
      %112 = vsyncadd [#allocation15], %s111
      %s113 = sshll.u32 [#allocation14], 4
      %s114 = int_to_ptr.vmem [resolvable:$true] %s113
      %119 = dma.hbm_to_vmem [thread:$0]  %s7, 1024, %s114, [#allocation15], 128, 128, 8
    $region33: #{tpu_custom_call.1} parent=1 // pred_fallthru
      _
    // Predicated region
    $region34: #{tpu_custom_call.1} parent=1 // pred_check
      _
    $region35: #{tpu_custom_call.1} parent=1 // pred_check_branch
      %121 = sbr.rel (0) target = $region37
    $region36: #{tpu_custom_call.1} parent=1 // pred_region
      %s123 = ssub.s32 32, 32
      %124 = vsyncadd [#allocation15], %s123
      %s126 = sshll.u32 [#allocation16], 4
      %s127 = int_to_ptr.vmem [resolvable:$true] %s126
      %129 = dma.hbm_to_vmem [thread:$0]  %s8, 32, %s127, [#allocation15]
    $region37: #{tpu_custom_call.1} parent=1 // pred_fallthru
      _
    // Predicated region
    $region38: #{tpu_custom_call.1} parent=1 // pred_check
      _
    $region39: #{tpu_custom_call.1} parent=1 // pred_check_branch
      %131 = sbr.rel (0) target = $region41
    $region40: #{tpu_custom_call.1} parent=1 // pred_region
      _
    $region41: #{tpu_custom_call.1} parent=1 // pred_fallthru
      _
    // Predicated region
    $region42: #{tpu_custom_call.1} parent=1 // pred_check
      _
    $region43: #{tpu_custom_call.1} parent=1 // pred_check_branch
      %133 = sbr.rel (0) target = $region45
    $region44: #{tpu_custom_call.1} parent=1 // pred_region
      _
    $region45: #{tpu_custom_call.1} parent=1 // pred_fallthru
      _
    // Predicated region
    $region46: #{tpu_custom_call.1} parent=1 // pred_check
      _
    $region47: #{tpu_custom_call.1} parent=1 // pred_check_branch
      %135 = sbr.rel (0) target = $region49
    $region48: #{tpu_custom_call.1} parent=1 // pred_region
      _
    $region49: #{tpu_custom_call.1} parent=1 // pred_fallthru
      _
    // Predicated region
    $region50: #{tpu_custom_call.1} parent=1 // pred_check
      _
    $region51: #{tpu_custom_call.1} parent=1 // pred_check_branch
      %137 = sbr.rel (0) target = $region53
    $region52: #{tpu_custom_call.1} parent=1 // pred_region
      %s139 = ssub.s32 16, 16
      %140 = vsyncadd [#allocation18], %s139
      %s142 = sshll.u32 [#allocation17], 4
      %s143 = int_to_ptr.vmem [resolvable:$true] %s142
      %145 = dma.hbm_to_vmem [thread:$0]  %s12, 16, %s143, [#allocation18]
    $region53: #{tpu_custom_call.1} parent=1 // pred_fallthru
      _
    // Predicated region
    $region54: #{tpu_custom_call.1} parent=1 // pred_check
      _
    $region55: #{tpu_custom_call.1} parent=1 // pred_check_branch
      %147 = sbr.rel (0) target = $region57
    $region56: #{tpu_custom_call.1} parent=1 // pred_region
      _
    $region57: #{tpu_custom_call.1} parent=1 // pred_fallthru
      _
    // Predicated region
    $region58: #{tpu_custom_call.1} parent=1 // pred_check
      _
    $region59: #{tpu_custom_call.1} parent=1 // pred_check_branch
      %149 = sbr.rel (0) target = $region61
    $region60: #{tpu_custom_call.1} parent=1 // pred_region
      _
    $region61: #{tpu_custom_call.1} parent=1 // pred_fallthru
      _
    // Predicated region
    $region62: #{tpu_custom_call.1} parent=1 // pred_check
      _
    $region63: #{tpu_custom_call.1} parent=1 // pred_check_branch
      %151 = sbr.rel (0) target = $region65
    $region64: #{tpu_custom_call.1} parent=1 // pred_region
      _
    $region65: #{tpu_custom_call.1} parent=1 // pred_fallthru
      _
    // Predicated region
    $region66: #{tpu_custom_call.1} parent=1 // pred_check
      _
    $region67: #{tpu_custom_call.1} parent=1 // pred_check_branch
      %153 = sbr.rel (0) target = $region69
    $region68: #{tpu_custom_call.1} parent=1 // pred_region
      _
    $region69: #{tpu_custom_call.1} parent=1 // pred_fallthru
      _
    // Predicated region
    $region70: #{tpu_custom_call.1} parent=1 // pred_check
      _
    $region71: #{tpu_custom_call.1} parent=1 // pred_check_branch
      %155 = sbr.rel (0) target = $region73
    $region72: #{tpu_custom_call.1} parent=1 // pred_region
      %156 = dma.done [#allocation3], 32
    $region73: #{tpu_custom_call.1} parent=1 // pred_fallthru
      _
    // Predicated region
    $region74: #{tpu_custom_call.1} parent=1 // pred_check
      _
    $region75: #{tpu_custom_call.1} parent=1 // pred_check_branch
      %158 = sbr.rel (0) target = $region77
    $region76: #{tpu_custom_call.1} parent=1 // pred_region
      %159 = dma.done [#allocation6], 128
    $region77: #{tpu_custom_call.1} parent=1 // pred_fallthru
      _
    // Predicated region
    $region78: #{tpu_custom_call.1} parent=1 // pred_check
      _
    $region79: #{tpu_custom_call.1} parent=1 // pred_check_branch
      %161 = sbr.rel (0) target = $region81
    $region80: #{tpu_custom_call.1} parent=1 // pred_region
      %162 = dma.done [#allocation6], 32
    $region81: #{tpu_custom_call.1} parent=1 // pred_fallthru
      _
    // Predicated region
    $region82: #{tpu_custom_call.1} parent=1 // pred_check
      _
    $region83: #{tpu_custom_call.1} parent=1 // pred_check_branch
      %164 = sbr.rel (0) target = $region85
    $region84: #{tpu_custom_call.1} parent=1 // pred_region
      %165 = dma.done [#allocation9], 32
    $region85: #{tpu_custom_call.1} parent=1 // pred_fallthru
      _
    // Predicated region
    $region86: #{tpu_custom_call.1} parent=1 // pred_check
      _
    $region87: #{tpu_custom_call.1} parent=1 // pred_check_branch
      %167 = sbr.rel (0) target = $region89
    $region88: #{tpu_custom_call.1} parent=1 // pred_region
      %168 = dma.done [#allocation9], 1024
    $region89: #{tpu_custom_call.1} parent=1 // pred_fallthru
      _
    // Predicated region
    $region90: #{tpu_custom_call.1} parent=1 // pred_check
      _
    $region91: #{tpu_custom_call.1} parent=1 // pred_check_branch
      %170 = sbr.rel (0) target = $region93
    $region92: #{tpu_custom_call.1} parent=1 // pred_region
      %171 = dma.done [#allocation12], 8192
    $region93: #{tpu_custom_call.1} parent=1 // pred_fallthru
      _
    // Predicated region
    $region94: #{tpu_custom_call.1} parent=1 // pred_check
      _
    $region95: #{tpu_custom_call.1} parent=1 // pred_check_branch
      %173 = sbr.rel (0) target = $region97
    $region96: #{tpu_custom_call.1} parent=1 // pred_region
      %174 = dma.done [#allocation12], 1024
    $region97: #{tpu_custom_call.1} parent=1 // pred_fallthru
      _
    // Predicated region
    $region98: #{tpu_custom_call.1} parent=1 // pred_check
      _
    $region99: #{tpu_custom_call.1} parent=1 // pred_check_branch
      %176 = sbr.rel (0) target = $region101
    $region100: #{tpu_custom_call.1} parent=1 // pred_region
      %177 = dma.done [#allocation15], 1024
    $region101: #{tpu_custom_call.1} parent=1 // pred_fallthru
      _
    // Predicated region
    $region102: #{tpu_custom_call.1} parent=1 // pred_check
      _
    $region103: #{tpu_custom_call.1} parent=1 // pred_check_branch
      %179 = sbr.rel (0) target = $region105
    $region104: #{tpu_custom_call.1} parent=1 // pred_region
      %180 = dma.done [#allocation15], 32
    $region105: #{tpu_custom_call.1} parent=1 // pred_fallthru
      _
    // Predicated region
    $region106: #{tpu_custom_call.1} parent=1 // pred_check
      _
    $region107: #{tpu_custom_call.1} parent=1 // pred_check_branch
      %182 = sbr.rel (0) target = $region109
    $region108: #{tpu_custom_call.1} parent=1 // pred_region
      %183 = dma.done [#allocation18], 16
    $region109: #{tpu_custom_call.1} parent=1 // pred_fallthru
      _
    %v185 = vld [vmem:[#allocation2] sm:$0x3]
    %v186 = vpack.c.bf16 %v185, %v185
    %v187 = vld [vmem:[#allocation10] sm:$0xff]
    %v188 = vld [vmem:[#allocation10 + $0x8] sm:$0xff]
    %v189 = vld [vmem:[#allocation10 + $0x10] sm:$0xff]
    %v190 = vld [vmem:[#allocation10 + $0x18] sm:$0xff]
    %v191 = vld [vmem:[#allocation10 + $0x20] sm:$0xff]
    %v192 = vld [vmem:[#allocation10 + $0x28] sm:$0xff]
    %v193 = vld [vmem:[#allocation10 + $0x30] sm:$0xff]
    %v194 = vld [vmem:[#allocation10 + $0x38] sm:$0xff]
    %v195 = vld [vmem:[#allocation5] sm:$0xff]
    %v197 = vcombine.high %v195, %v195
    %v199 = vunpack.c.l.s4 1983009808
    %v200 = vunpack.c.0.s8 %v199
    %v201 = vlaneseq
    %v202 = vshrl.u32 %v201, 7
    %v203 = vsub.s32 %v200, %v202
    %v204 = vrot.slane %v195, %v203
    %v206 = vunpack.c.l.s4 1983009808
    %v207 = vunpack.c.0.s8 %v206
    %v208 = vlaneseq
    %v209 = vshrl.u32 %v208, 7
    %v210 = vsub.s32 %v207, %v209
    %v211 = vrot.slane %v197, %v210
    %v212 = vcombine.high %v204, %v204
    %v213 = vcombine.high %v211, %v211
    %v218 = vpack.c.bf16 %v204, %v204
    %v219 = vpack.c.bf16 %v212, %v212
    %v220 = vpack.c.bf16 %v211, %v211
    %v221 = vpack.c.bf16 %v213, %v213
    %v222 = vld [vmem:[#allocation11] sm:$0xff]
    %v223 = vld [vmem:[#allocation11 + $0x8] sm:$0xff]
    %v224 = vld [vmem:[#allocation11 + $0x10] sm:$0xff]
    %v225 = vld [vmem:[#allocation11 + $0x18] sm:$0xff]
    %v226 = vld [vmem:[#allocation11 + $0x20] sm:$0xff]
    %v227 = vld [vmem:[#allocation11 + $0x28] sm:$0xff]
    %v228 = vld [vmem:[#allocation11 + $0x30] sm:$0xff]
    %v229 = vld [vmem:[#allocation11 + $0x38] sm:$0xff]
    %v230 = vld [vmem:[#allocation11 + $0x40] sm:$0xff]
    %v231 = vld [vmem:[#allocation11 + $0x48] sm:$0xff]
    %v232 = vld [vmem:[#allocation11 + $0x50] sm:$0xff]
    %v233 = vld [vmem:[#allocation11 + $0x58] sm:$0xff]
    %v234 = vld [vmem:[#allocation11 + $0x60] sm:$0xff]
    %v235 = vld [vmem:[#allocation11 + $0x68] sm:$0xff]
    %v236 = vld [vmem:[#allocation11 + $0x70] sm:$0xff]
    %v237 = vld [vmem:[#allocation11 + $0x78] sm:$0xff]
    %v238 = vld [vmem:[#allocation11 + $0x80] sm:$0xff]
    %v239 = vld [vmem:[#allocation11 + $0x88] sm:$0xff]
    %v240 = vld [vmem:[#allocation11 + $0x90] sm:$0xff]
    %v241 = vld [vmem:[#allocation11 + $0x98] sm:$0xff]
    %v242 = vld [vmem:[#allocation11 + $0xa0] sm:$0xff]
    %v243 = vld [vmem:[#allocation11 + $0xa8] sm:$0xff]
    %v244 = vld [vmem:[#allocation11 + $0xb0] sm:$0xff]
    %v245 = vld [vmem:[#allocation11 + $0xb8] sm:$0xff]
    %v246 = vld [vmem:[#allocation11 + $0xc0] sm:$0xff]
    %v247 = vld [vmem:[#allocation11 + $0xc8] sm:$0xff]
    %v248 = vld [vmem:[#allocation11 + $0xd0] sm:$0xff]
    %v249 = vld [vmem:[#allocation11 + $0xd8] sm:$0xff]
    %v250 = vld [vmem:[#allocation11 + $0xe0] sm:$0xff]
    %v251 = vld [vmem:[#allocation11 + $0xe8] sm:$0xff]
    %v252 = vld [vmem:[#allocation11 + $0xf0] sm:$0xff]
    %v253 = vld [vmem:[#allocation11 + $0xf8] sm:$0xff]
    %v254 = vld [vmem:[#allocation11 + $0x100] sm:$0xff]
    %v255 = vld [vmem:[#allocation11 + $0x108] sm:$0xff]
    %v256 = vld [vmem:[#allocation11 + $0x110] sm:$0xff]
    %v257 = vld [vmem:[#allocation11 + $0x118] sm:$0xff]
    %v258 = vld [vmem:[#allocation11 + $0x120] sm:$0xff]
    %v259 = vld [vmem:[#allocation11 + $0x128] sm:$0xff]
    %v260 = vld [vmem:[#allocation11 + $0x130] sm:$0xff]
    %v261 = vld [vmem:[#allocation11 + $0x138] sm:$0xff]
    %v262 = vld [vmem:[#allocation11 + $0x140] sm:$0xff]
    %v263 = vld [vmem:[#allocation11 + $0x148] sm:$0xff]
    %v264 = vld [vmem:[#allocation11 + $0x150] sm:$0xff]
    %v265 = vld [vmem:[#allocation11 + $0x158] sm:$0xff]
    %v266 = vld [vmem:[#allocation11 + $0x160] sm:$0xff]
    %v267 = vld [vmem:[#allocation11 + $0x168] sm:$0xff]
    %v268 = vld [vmem:[#allocation11 + $0x170] sm:$0xff]
    %v269 = vld [vmem:[#allocation11 + $0x178] sm:$0xff]
    %v270 = vld [vmem:[#allocation11 + $0x180] sm:$0xff]
    %v271 = vld [vmem:[#allocation11 + $0x188] sm:$0xff]
    %v272 = vld [vmem:[#allocation11 + $0x190] sm:$0xff]
    %v273 = vld [vmem:[#allocation11 + $0x198] sm:$0xff]
    %v274 = vld [vmem:[#allocation11 + $0x1a0] sm:$0xff]
    %v275 = vld [vmem:[#allocation11 + $0x1a8] sm:$0xff]
    %v276 = vld [vmem:[#allocation11 + $0x1b0] sm:$0xff]
    %v277 = vld [vmem:[#allocation11 + $0x1b8] sm:$0xff]
    %v278 = vld [vmem:[#allocation11 + $0x1c0] sm:$0xff]
    %v279 = vld [vmem:[#allocation11 + $0x1c8] sm:$0xff]
    %v280 = vld [vmem:[#allocation11 + $0x1d0] sm:$0xff]
    %v281 = vld [vmem:[#allocation11 + $0x1d8] sm:$0xff]
    %v282 = vld [vmem:[#allocation11 + $0x1e0] sm:$0xff]
    %v283 = vld [vmem:[#allocation11 + $0x1e8] sm:$0xff]
    %v284 = vld [vmem:[#allocation11 + $0x1f0] sm:$0xff]
    %v285 = vld [vmem:[#allocation11 + $0x1f8] sm:$0xff]
    %v350 = vunpack.c.l.b16 %v222
    %v351 = vunpack.c.h.b16 %v222
    %v352 = vunpack.c.l.b16 %v223
    %v353 = vunpack.c.h.b16 %v223
    %v354 = vunpack.c.l.b16 %v224
    %v355 = vunpack.c.h.b16 %v224
    %v356 = vunpack.c.l.b16 %v225
    %v357 = vunpack.c.h.b16 %v225
    %v358 = vunpack.c.l.b16 %v226
    %v359 = vunpack.c.h.b16 %v226
    %v360 = vunpack.c.l.b16 %v227
    %v361 = vunpack.c.h.b16 %v227
    %v362 = vunpack.c.l.b16 %v228
    %v363 = vunpack.c.h.b16 %v228
    %v364 = vunpack.c.l.b16 %v229
    %v365 = vunpack.c.h.b16 %v229
    %v366 = vunpack.c.l.b16 %v230
    %v367 = vunpack.c.h.b16 %v230
    %v368 = vunpack.c.l.b16 %v231
    %v369 = vunpack.c.h.b16 %v231
    %v370 = vunpack.c.l.b16 %v232
    %v371 = vunpack.c.h.b16 %v232
    %v372 = vunpack.c.l.b16 %v233
    %v373 = vunpack.c.h.b16 %v233
    %v374 = vunpack.c.l.b16 %v234
    %v375 = vunpack.c.h.b16 %v234
    %v376 = vunpack.c.l.b16 %v235
    %v377 = vunpack.c.h.b16 %v235
    %v378 = vunpack.c.l.b16 %v236
    %v379 = vunpack.c.h.b16 %v236
    %v380 = vunpack.c.l.b16 %v237
    %v381 = vunpack.c.h.b16 %v237
    %v382 = vunpack.c.l.b16 %v238
    %v383 = vunpack.c.h.b16 %v238
    %v384 = vunpack.c.l.b16 %v239
    %v385 = vunpack.c.h.b16 %v239
    %v386 = vunpack.c.l.b16 %v240
    %v387 = vunpack.c.h.b16 %v240
    %v388 = vunpack.c.l.b16 %v241
    %v389 = vunpack.c.h.b16 %v241
    %v390 = vunpack.c.l.b16 %v242
    %v391 = vunpack.c.h.b16 %v242
    %v392 = vunpack.c.l.b16 %v243
    %v393 = vunpack.c.h.b16 %v243
    %v394 = vunpack.c.l.b16 %v244
    %v395 = vunpack.c.h.b16 %v244
    %v396 = vunpack.c.l.b16 %v245
    %v397 = vunpack.c.h.b16 %v245
    %v398 = vunpack.c.l.b16 %v246
    %v399 = vunpack.c.h.b16 %v246
    %v400 = vunpack.c.l.b16 %v247
    %v401 = vunpack.c.h.b16 %v247
    %v402 = vunpack.c.l.b16 %v248
    %v403 = vunpack.c.h.b16 %v248
    %v404 = vunpack.c.l.b16 %v249
    %v405 = vunpack.c.h.b16 %v249
    %v406 = vunpack.c.l.b16 %v250
    %v407 = vunpack.c.h.b16 %v250
    %v408 = vunpack.c.l.b16 %v251
    %v409 = vunpack.c.h.b16 %v251
    %v410 = vunpack.c.l.b16 %v252
    %v411 = vunpack.c.h.b16 %v252
    %v412 = vunpack.c.l.b16 %v253
    %v413 = vunpack.c.h.b16 %v253
    %v414 = vunpack.c.l.b16 %v254
    %v415 = vunpack.c.h.b16 %v254
    %v416 = vunpack.c.l.b16 %v255
    %v417 = vunpack.c.h.b16 %v255
    %v418 = vunpack.c.l.b16 %v256
    %v419 = vunpack.c.h.b16 %v256
    %v420 = vunpack.c.l.b16 %v257
    %v421 = vunpack.c.h.b16 %v257
    %v422 = vunpack.c.l.b16 %v258
    %v423 = vunpack.c.h.b16 %v258
    %v424 = vunpack.c.l.b16 %v259
    %v425 = vunpack.c.h.b16 %v259
    %v426 = vunpack.c.l.b16 %v260
    %v427 = vunpack.c.h.b16 %v260
    %v428 = vunpack.c.l.b16 %v261
    %v429 = vunpack.c.h.b16 %v261
    %v430 = vunpack.c.l.b16 %v262
    %v431 = vunpack.c.h.b16 %v262
    %v432 = vunpack.c.l.b16 %v263
    %v433 = vunpack.c.h.b16 %v263
    %v434 = vunpack.c.l.b16 %v264
    %v435 = vunpack.c.h.b16 %v264
    %v436 = vunpack.c.l.b16 %v265
    %v437 = vunpack.c.h.b16 %v265
    %v438 = vunpack.c.l.b16 %v266
    %v439 = vunpack.c.h.b16 %v266
    %v440 = vunpack.c.l.b16 %v267
    %v441 = vunpack.c.h.b16 %v267
    %v442 = vunpack.c.l.b16 %v268
    %v443 = vunpack.c.h.b16 %v268
    %v444 = vunpack.c.l.b16 %v269
    %v445 = vunpack.c.h.b16 %v269
    %v446 = vunpack.c.l.b16 %v270
    %v447 = vunpack.c.h.b16 %v270
    %v448 = vunpack.c.l.b16 %v271
    %v449 = vunpack.c.h.b16 %v271
    %v450 = vunpack.c.l.b16 %v272
    %v451 = vunpack.c.h.b16 %v272
    %v452 = vunpack.c.l.b16 %v273
    %v453 = vunpack.c.h.b16 %v273
    %v454 = vunpack.c.l.b16 %v274
    %v455 = vunpack.c.h.b16 %v274
    %v456 = vunpack.c.l.b16 %v275
    %v457 = vunpack.c.h.b16 %v275
    %v458 = vunpack.c.l.b16 %v276
    %v459 = vunpack.c.h.b16 %v276
    %v460 = vunpack.c.l.b16 %v277
    %v461 = vunpack.c.h.b16 %v277
    %v462 = vunpack.c.l.b16 %v278
    %v463 = vunpack.c.h.b16 %v278
    %v464 = vunpack.c.l.b16 %v279
    %v465 = vunpack.c.h.b16 %v279
    %v466 = vunpack.c.l.b16 %v280
    %v467 = vunpack.c.h.b16 %v280
    %v468 = vunpack.c.l.b16 %v281
    %v469 = vunpack.c.h.b16 %v281
    %v470 = vunpack.c.l.b16 %v282
    %v471 = vunpack.c.h.b16 %v282
    %v472 = vunpack.c.l.b16 %v283
    %v473 = vunpack.c.h.b16 %v283
    %v474 = vunpack.c.l.b16 %v284
    %v475 = vunpack.c.h.b16 %v284
    %v476 = vunpack.c.l.b16 %v285
    %v477 = vunpack.c.h.b16 %v285
    %v478 = vpack.c.b16 %v352, %v350
    %v479 = vpack.c.b16 %v353, %v351
    %v480 = vpack.c.b16 %v356, %v354
    %v481 = vpack.c.b16 %v357, %v355
    %v482 = vpack.c.b16 %v360, %v358
    %v483 = vpack.c.b16 %v361, %v359
    %v484 = vpack.c.b16 %v364, %v362
    %v485 = vpack.c.b16 %v365, %v363
    %v486 = vpack.c.b16 %v368, %v366
    %v487 = vpack.c.b16 %v369, %v367
    %v488 = vpack.c.b16 %v372, %v370
    %v489 = vpack.c.b16 %v373, %v371
    %v490 = vpack.c.b16 %v376, %v374
    %v491 = vpack.c.b16 %v377, %v375
    %v492 = vpack.c.b16 %v380, %v378
    %v493 = vpack.c.b16 %v381, %v379
    %v494 = vpack.c.b16 %v384, %v382
    %v495 = vpack.c.b16 %v385, %v383
    %v496 = vpack.c.b16 %v388, %v386
    %v497 = vpack.c.b16 %v389, %v387
    %v498 = vpack.c.b16 %v392, %v390
    %v499 = vpack.c.b16 %v393, %v391
    %v500 = vpack.c.b16 %v396, %v394
    %v501 = vpack.c.b16 %v397, %v395
    %v502 = vpack.c.b16 %v400, %v398
    %v503 = vpack.c.b16 %v401, %v399
    %v504 = vpack.c.b16 %v404, %v402
    %v505 = vpack.c.b16 %v405, %v403
    %v506 = vpack.c.b16 %v408, %v406
    %v507 = vpack.c.b16 %v409, %v407
    %v508 = vpack.c.b16 %v412, %v410
    %v509 = vpack.c.b16 %v413, %v411
    %v510 = vpack.c.b16 %v416, %v414
    %v511 = vpack.c.b16 %v417, %v415
    %v512 = vpack.c.b16 %v420, %v418
    %v513 = vpack.c.b16 %v421, %v419
    %v514 = vpack.c.b16 %v424, %v422
    %v515 = vpack.c.b16 %v425, %v423
    %v516 = vpack.c.b16 %v428, %v426
    %v517 = vpack.c.b16 %v429, %v427
    %v518 = vpack.c.b16 %v432, %v430
    %v519 = vpack.c.b16 %v433, %v431
    %v520 = vpack.c.b16 %v436, %v434
    %v521 = vpack.c.b16 %v437, %v435
    %v522 = vpack.c.b16 %v440, %v438
    %v523 = vpack.c.b16 %v441, %v439
    %v524 = vpack.c.b16 %v444, %v442
    %v525 = vpack.c.b16 %v445, %v443
    %v526 = vpack.c.b16 %v448, %v446
    %v527 = vpack.c.b16 %v449, %v447
    %v528 = vpack.c.b16 %v452, %v450
    %v529 = vpack.c.b16 %v453, %v451
    %v530 = vpack.c.b16 %v456, %v454
    %v531 = vpack.c.b16 %v457, %v455
    %v532 = vpack.c.b16 %v460, %v458
    %v533 = vpack.c.b16 %v461, %v459
    %v534 = vpack.c.b16 %v464, %v462
    %v535 = vpack.c.b16 %v465, %v463
    %v536 = vpack.c.b16 %v468, %v466
    %v537 = vpack.c.b16 %v469, %v467
    %v538 = vpack.c.b16 %v472, %v470
    %v539 = vpack.c.b16 %v473, %v471
    %v540 = vpack.c.b16 %v476, %v474
    %v541 = vpack.c.b16 %v477, %v475
    %606 = vmatprep.subr.bf16.mxu0 %v479
    %607 = vmatpush1.bf16.msra.mxu0 %v478
    %608 = vmatprep.subr.bf16.mxu0 %v481
    %609 = vmatpush1.bf16.msra.mxu0 %v480
    %610 = vmatprep.subr.bf16.mxu0 %v483
    %611 = vmatpush1.bf16.msra.mxu0 %v482
    %612 = vmatprep.subr.bf16.mxu0 %v485
    %613 = vmatpush1.bf16.msra.mxu0 %v484
    %614 = vmatprep.subr.bf16.mxu0 %v487
    %615 = vmatpush1.bf16.msra.mxu0 %v486
    %616 = vmatprep.subr.bf16.mxu0 %v489
    %617 = vmatpush1.bf16.msra.mxu0 %v488
    %618 = vmatprep.subr.bf16.mxu0 %v491
    %619 = vmatpush1.bf16.msra.mxu0 %v490
    %620 = vmatprep.subr.bf16.mxu0 %v493
    %621 = vmatpush1.bf16.msra.mxu0 %v492
    %622 = vmatprep.subr.bf16.mxu0 %v495
    %623 = vmatpush1.bf16.msra.mxu0 %v494
    %624 = vmatprep.subr.bf16.mxu0 %v497
    %625 = vmatpush1.bf16.msra.mxu0 %v496
    %626 = vmatprep.subr.bf16.mxu0 %v499
    %627 = vmatpush1.bf16.msra.mxu0 %v498
    %628 = vmatprep.subr.bf16.mxu0 %v501
    %629 = vmatpush1.bf16.msra.mxu0 %v500
    %630 = vmatprep.subr.bf16.mxu0 %v503
    %631 = vmatpush1.bf16.msra.mxu0 %v502
    %632 = vmatprep.subr.bf16.mxu0 %v505
    %633 = vmatpush1.bf16.msra.mxu0 %v504
    %634 = vmatprep.subr.bf16.mxu0 %v507
    %635 = vmatpush1.bf16.msra.mxu0 %v506
    %636 = vmatprep.subr.bf16.mxu0 %v509
    %637 = vmatpush1.bf16.msra.mxu0 %v508
    %638 = vmatprep.mubr.bf16.mxu0 %v219
    %639 = vmatmul.mubr.bf16.gmra.mrb[0].mxu0 %v218
    %v640 = vpop.f32.mrb[0].mxu0
    %v641 = vadd.f32 0.0, %v640
    %v642 = vpop.f32.mrb[0].mxu0
    %v643 = vadd.f32 0.0, %v642
    %v644 = vpop.f32.mrb[0].mxu0
    %v645 = vpop.f32.mrb[0].mxu0
    %646 = vdwg.mxu0
    %647 = vmatprep.subr.bf16.mxu0 %v511
    %648 = vmatpush1.bf16.msra.mxu0 %v510
    %649 = vmatprep.subr.bf16.mxu0 %v513
    %650 = vmatpush1.bf16.msra.mxu0 %v512
    %651 = vmatprep.subr.bf16.mxu0 %v515
    %652 = vmatpush1.bf16.msra.mxu0 %v514
    %653 = vmatprep.subr.bf16.mxu0 %v517
    %654 = vmatpush1.bf16.msra.mxu0 %v516
    %655 = vmatprep.subr.bf16.mxu0 %v519
    %656 = vmatpush1.bf16.msra.mxu0 %v518
    %657 = vmatprep.subr.bf16.mxu0 %v521
    %658 = vmatpush1.bf16.msra.mxu0 %v520
    %659 = vmatprep.subr.bf16.mxu0 %v523
    %660 = vmatpush1.bf16.msra.mxu0 %v522
    %661 = vmatprep.subr.bf16.mxu0 %v525
    %662 = vmatpush1.bf16.msra.mxu0 %v524
    %663 = vmatprep.subr.bf16.mxu0 %v527
    %664 = vmatpush1.bf16.msra.mxu0 %v526
    %665 = vmatprep.subr.bf16.mxu0 %v529
    %666 = vmatpush1.bf16.msra.mxu0 %v528
    %667 = vmatprep.subr.bf16.mxu0 %v531
    %668 = vmatpush1.bf16.msra.mxu0 %v530
    %669 = vmatprep.subr.bf16.mxu0 %v533
    %670 = vmatpush1.bf16.msra.mxu0 %v532
    %671 = vmatprep.subr.bf16.mxu0 %v535
    %672 = vmatpush1.bf16.msra.mxu0 %v534
    %673 = vmatprep.subr.bf16.mxu0 %v537
    %674 = vmatpush1.bf16.msra.mxu0 %v536
    %675 = vmatprep.subr.bf16.mxu0 %v539
    %676 = vmatpush1.bf16.msra.mxu0 %v538
    %677 = vmatprep.subr.bf16.mxu0 %v541
    %678 = vmatpush1.bf16.msra.mxu0 %v540
    %679 = vmatprep.mubr.bf16.mxu0 %v221
    %680 = vmatmul.mubr.bf16.gmra.mrb[0].mxu0 %v220
    %v681 = vpop.f32.mrb[0].mxu0
    %v682 = vadd.f32 %v641, %v681
    %v683 = vpop.f32.mrb[0].mxu0
    %v684 = vadd.f32 %v643, %v683
    %v685 = vpop.f32.mrb[0].mxu0
    %v686 = vpop.f32.mrb[0].mxu0
    %687 = vdwg.mxu0
    %v696 = vunpack.c.l.b16 %v187
    %v697 = vunpack.c.h.b16 %v187
    %v698 = vunpack.c.l.b16 %v188
    %v699 = vunpack.c.h.b16 %v188
    %v700 = vunpack.c.l.b16 %v189
    %v701 = vunpack.c.h.b16 %v189
    %v702 = vunpack.c.l.b16 %v190
    %v703 = vunpack.c.h.b16 %v190
    %v704 = vunpack.c.l.b16 %v191
    %v705 = vunpack.c.h.b16 %v191
    %v706 = vunpack.c.l.b16 %v192
    %v707 = vunpack.c.h.b16 %v192
    %v708 = vunpack.c.l.b16 %v193
    %v709 = vunpack.c.h.b16 %v193
    %v710 = vunpack.c.l.b16 %v194
    %v711 = vunpack.c.h.b16 %v194
    %v712 = vpack.c.b16 %v698, %v696
    %v713 = vpack.c.b16 %v699, %v697
    %v714 = vpack.c.b16 %v702, %v700
    %v715 = vpack.c.b16 %v703, %v701
    %v716 = vpack.c.b16 %v706, %v704
    %v717 = vpack.c.b16 %v707, %v705
    %v718 = vpack.c.b16 %v710, %v708
    %v719 = vpack.c.b16 %v711, %v709
    %vm728 = vcmask 523264
    %v730 = vsel %vm728, %v186, 0
    %732 = vmatprep.subr.bf16.mxu0 %v713
    %733 = vmatpush1.bf16.msra.mxu0 %v712
    %734 = vmatprep.subr.bf16.mxu0 %v715
    %735 = vmatpush1.bf16.msra.mxu0 %v714
    %736 = vmatprep.subr.bf16.mxu0 %v717
    %737 = vmatpush1.bf16.msra.mxu0 %v716
    %738 = vmatprep.subr.bf16.mxu0 %v719
    %739 = vmatpush1.bf16.msra.mxu0 %v718
    %740 = vmatprep.subr.bf16.mxu0 0
    %741 = vmatpush1.bf16.msra.mxu0 0
    %742 = vmatprep.subr.bf16.mxu0 0
    %743 = vmatpush1.bf16.msra.mxu0 0
    %744 = vmatprep.subr.bf16.mxu0 0
    %745 = vmatpush1.bf16.msra.mxu0 0
    %746 = vmatprep.subr.bf16.mxu0 0
    %747 = vmatpush1.bf16.msra.mxu0 0
    %748 = vmatprep.subr.bf16.mxu0 0
    %749 = vmatpush1.bf16.msra.mxu0 0
    %750 = vmatprep.subr.bf16.mxu0 0
    %751 = vmatpush1.bf16.msra.mxu0 0
    %752 = vmatprep.subr.bf16.mxu0 0
    %753 = vmatpush1.bf16.msra.mxu0 0
    %754 = vmatprep.subr.bf16.mxu0 0
    %755 = vmatpush1.bf16.msra.mxu0 0
    %756 = vmatprep.subr.bf16.mxu0 0
    %757 = vmatpush1.bf16.msra.mxu0 0
    %758 = vmatprep.subr.bf16.mxu0 0
    %759 = vmatpush1.bf16.msra.mxu0 0
    %760 = vmatprep.subr.bf16.mxu0 0
    %761 = vmatpush1.bf16.msra.mxu0 0
    %762 = vmatprep.subr.bf16.mxu0 0
    %763 = vmatpush1.bf16.msra.mxu0 0
    %764 = vmatprep.mubr.bf16.mxu0 0
    %765 = vmatmul.mubr.bf16.gmra.mrb[0].mxu0 %v730
    %v766 = vpop.f32.mrb[0].mxu0
    %v767 = vadd.f32 %v682, %v766
    %v768 = vpop.f32.mrb[0].mxu0
    %v769 = vadd.f32 %v684, %v768
    %v770 = vpop.f32.mrb[0].mxu0
    %v771 = vpop.f32.mrb[0].mxu0
    %772 = vdwg.mxu0
    %v773 = vld [vmem:[#allocation7] sm:$0x3]
    %v774 = vpack.c.bf16 %v773, %v773
    %v775 = vld [vmem:[#allocation13] sm:$0xff]
    %v776 = vld [vmem:[#allocation13 + $0x8] sm:$0xff]
    %v777 = vld [vmem:[#allocation13 + $0x10] sm:$0xff]
    %v778 = vld [vmem:[#allocation13 + $0x18] sm:$0xff]
    %v779 = vld [vmem:[#allocation13 + $0x20] sm:$0xff]
    %v780 = vld [vmem:[#allocation13 + $0x28] sm:$0xff]
    %v781 = vld [vmem:[#allocation13 + $0x30] sm:$0xff]
    %v782 = vld [vmem:[#allocation13 + $0x38] sm:$0xff]
    %v791 = vunpack.c.l.b16 %v775
    %v792 = vunpack.c.h.b16 %v775
    %v793 = vunpack.c.l.b16 %v776
    %v794 = vunpack.c.h.b16 %v776
    %v795 = vunpack.c.l.b16 %v777
    %v796 = vunpack.c.h.b16 %v777
    %v797 = vunpack.c.l.b16 %v778
    %v798 = vunpack.c.h.b16 %v778
    %v799 = vunpack.c.l.b16 %v779
    %v800 = vunpack.c.h.b16 %v779
    %v801 = vunpack.c.l.b16 %v780
    %v802 = vunpack.c.h.b16 %v780
    %v803 = vunpack.c.l.b16 %v781
    %v804 = vunpack.c.h.b16 %v781
    %v805 = vunpack.c.l.b16 %v782
    %v806 = vunpack.c.h.b16 %v782
    %v807 = vpack.c.b16 %v793, %v791
    %v808 = vpack.c.b16 %v794, %v792
    %v809 = vpack.c.b16 %v797, %v795
    %v810 = vpack.c.b16 %v798, %v796
    %v811 = vpack.c.b16 %v801, %v799
    %v812 = vpack.c.b16 %v802, %v800
    %v813 = vpack.c.b16 %v805, %v803
    %v814 = vpack.c.b16 %v806, %v804
    %v824 = vsel %vm728, %v774, 0
    %826 = vmatprep.subr.bf16.mxu0 %v808
    %827 = vmatpush1.bf16.msra.mxu0 %v807
    %828 = vmatprep.subr.bf16.mxu0 %v810
    %829 = vmatpush1.bf16.msra.mxu0 %v809
    %830 = vmatprep.subr.bf16.mxu0 %v812
    %831 = vmatpush1.bf16.msra.mxu0 %v811
    %832 = vmatprep.subr.bf16.mxu0 %v814
    %833 = vmatpush1.bf16.msra.mxu0 %v813
    %834 = vmatprep.subr.bf16.mxu0 0
    %835 = vmatpush1.bf16.msra.mxu0 0
    %836 = vmatprep.subr.bf16.mxu0 0
    %837 = vmatpush1.bf16.msra.mxu0 0
    %838 = vmatprep.subr.bf16.mxu0 0
    %839 = vmatpush1.bf16.msra.mxu0 0
    %840 = vmatprep.subr.bf16.mxu0 0
    %841 = vmatpush1.bf16.msra.mxu0 0
    %842 = vmatprep.subr.bf16.mxu0 0
    %843 = vmatpush1.bf16.msra.mxu0 0
    %844 = vmatprep.subr.bf16.mxu0 0
    %845 = vmatpush1.bf16.msra.mxu0 0
    %846 = vmatprep.subr.bf16.mxu0 0
    %847 = vmatpush1.bf16.msra.mxu0 0
    %848 = vmatprep.subr.bf16.mxu0 0
    %849 = vmatpush1.bf16.msra.mxu0 0
    %850 = vmatprep.subr.bf16.mxu0 0
    %851 = vmatpush1.bf16.msra.mxu0 0
    %852 = vmatprep.subr.bf16.mxu0 0
    %853 = vmatpush1.bf16.msra.mxu0 0
    %854 = vmatprep.subr.bf16.mxu0 0
    %855 = vmatpush1.bf16.msra.mxu0 0
    %856 = vmatprep.subr.bf16.mxu0 0
    %857 = vmatpush1.bf16.msra.mxu0 0
    %858 = vmatprep.mubr.bf16.mxu0 0
    %859 = vmatmul.mubr.bf16.gmra.mrb[0].mxu0 %v824
    %v860 = vpop.f32.mrb[0].mxu0
    %v861 = vadd.f32 0.0, %v860
    %v862 = vpop.f32.mrb[0].mxu0
    %v863 = vadd.f32 0.0, %v862
    %v864 = vpop.f32.mrb[0].mxu0
    %v865 = vpop.f32.mrb[0].mxu0
    %866 = vdwg.mxu0
    %v867 = vadd.f32 %v767, %v861
    %v868 = vadd.f32 %v769, %v863
    %v869 = vld [vmem:[#allocation8] sm:$0x3]
    %v870 = vpack.c.bf16 %v869, %v869
    %v871 = vld [vmem:[#allocation14] sm:$0xff]
    %v872 = vld [vmem:[#allocation14 + $0x8] sm:$0xff]
    %v873 = vld [vmem:[#allocation14 + $0x10] sm:$0xff]
    %v874 = vld [vmem:[#allocation14 + $0x18] sm:$0xff]
    %v875 = vld [vmem:[#allocation14 + $0x20] sm:$0xff]
    %v876 = vld [vmem:[#allocation14 + $0x28] sm:$0xff]
    %v877 = vld [vmem:[#allocation14 + $0x30] sm:$0xff]
    %v878 = vld [vmem:[#allocation14 + $0x38] sm:$0xff]
    %v887 = vunpack.c.l.b16 %v871
    %v888 = vunpack.c.h.b16 %v871
    %v889 = vunpack.c.l.b16 %v872
    %v890 = vunpack.c.h.b16 %v872
    %v891 = vunpack.c.l.b16 %v873
    %v892 = vunpack.c.h.b16 %v873
    %v893 = vunpack.c.l.b16 %v874
    %v894 = vunpack.c.h.b16 %v874
    %v895 = vunpack.c.l.b16 %v875
    %v896 = vunpack.c.h.b16 %v875
    %v897 = vunpack.c.l.b16 %v876
    %v898 = vunpack.c.h.b16 %v876
    %v899 = vunpack.c.l.b16 %v877
    %v900 = vunpack.c.h.b16 %v877
    %v901 = vunpack.c.l.b16 %v878
    %v902 = vunpack.c.h.b16 %v878
    %v903 = vpack.c.b16 %v889, %v887
    %v904 = vpack.c.b16 %v890, %v888
    %v905 = vpack.c.b16 %v893, %v891
    %v906 = vpack.c.b16 %v894, %v892
    %v907 = vpack.c.b16 %v897, %v895
    %v908 = vpack.c.b16 %v898, %v896
    %v909 = vpack.c.b16 %v901, %v899
    %v910 = vpack.c.b16 %v902, %v900
    %v920 = vsel %vm728, %v870, 0
    %922 = vmatprep.subr.bf16.mxu0 %v904
    %923 = vmatpush1.bf16.msra.mxu0 %v903
    %924 = vmatprep.subr.bf16.mxu0 %v906
    %925 = vmatpush1.bf16.msra.mxu0 %v905
    %926 = vmatprep.subr.bf16.mxu0 %v908
    %927 = vmatpush1.bf16.msra.mxu0 %v907
    %928 = vmatprep.subr.bf16.mxu0 %v910
    %929 = vmatpush1.bf16.msra.mxu0 %v909
    %930 = vmatprep.subr.bf16.mxu0 0
    %931 = vmatpush1.bf16.msra.mxu0 0
    %932 = vmatprep.subr.bf16.mxu0 0
    %933 = vmatpush1.bf16.msra.mxu0 0
    %934 = vmatprep.subr.bf16.mxu0 0
    %935 = vmatpush1.bf16.msra.mxu0 0
    %936 = vmatprep.subr.bf16.mxu0 0
    %937 = vmatpush1.bf16.msra.mxu0 0
    %938 = vmatprep.subr.bf16.mxu0 0
    %939 = vmatpush1.bf16.msra.mxu0 0
    %940 = vmatprep.subr.bf16.mxu0 0
    %941 = vmatpush1.bf16.msra.mxu0 0
    %942 = vmatprep.subr.bf16.mxu0 0
    %943 = vmatpush1.bf16.msra.mxu0 0
    %944 = vmatprep.subr.bf16.mxu0 0
    %945 = vmatpush1.bf16.msra.mxu0 0
    %946 = vmatprep.subr.bf16.mxu0 0
    %947 = vmatpush1.bf16.msra.mxu0 0
    %948 = vmatprep.subr.bf16.mxu0 0
    %949 = vmatpush1.bf16.msra.mxu0 0
    %950 = vmatprep.subr.bf16.mxu0 0
    %951 = vmatpush1.bf16.msra.mxu0 0
    %952 = vmatprep.subr.bf16.mxu0 0
    %953 = vmatpush1.bf16.msra.mxu0 0
    %954 = vmatprep.mubr.bf16.mxu0 0
    %955 = vmatmul.mubr.bf16.gmra.mrb[0].mxu0 %v920
    %v956 = vpop.f32.mrb[0].mxu0
    %v957 = vadd.f32 0.0, %v956
    %v958 = vpop.f32.mrb[0].mxu0
    %v959 = vadd.f32 0.0, %v958
    %v960 = vpop.f32.mrb[0].mxu0
    %v961 = vpop.f32.mrb[0].mxu0
    %962 = vdwg.mxu0
    %v963 = vadd.f32 %v867, %v957
    %v964 = vadd.f32 %v868, %v959
    %v965 = vld [vmem:[#allocation16] sm:$0x3]
    %v967 = vlaneseq
    %v968 = vshrl.u32 %v967, 7
    %v969 = vsub.s32 0, %v968
    %v970 = vrot.slane %v965, %v969
    %v971 = vlaneseq
    %v972 = vshrl.u32 %v971, 7
    %v973 = vsub.s32 1, %v972
    %v974 = vrot.slane %v965, %v973
    %v977 = vadd.f32 %v963, %v970
    %v978 = vadd.f32 %v964, %v974
    %v979 = vmax.f32 %v977, 0.0
    %v980 = vmax.f32 %v978, 0.0
    %v981 = vpack.c.bf16 %v979, %v979
    %v982 = vpack.c.bf16 %v980, %v980
    %v983 = vld [vmem:[%s9] sm:$0xf]
    %v984 = vld [vmem:[%s9 + $0x4] sm:$0xf]
    %v985 = vld [vmem:[%s9 + $0x8] sm:$0xf]
    %v986 = vld [vmem:[%s9 + $0xc] sm:$0xf]
    %v987 = vld [vmem:[%s9 + $0x10] sm:$0xf]
    %v988 = vld [vmem:[%s9 + $0x14] sm:$0xf]
    %v989 = vld [vmem:[%s9 + $0x18] sm:$0xf]
    %v990 = vld [vmem:[%s9 + $0x1c] sm:$0xf]
    %v991 = vld [vmem:[%s9 + $0x20] sm:$0xf]
    %v992 = vld [vmem:[%s9 + $0x24] sm:$0xf]
    %v993 = vld [vmem:[%s9 + $0x28] sm:$0xf]
    %v994 = vld [vmem:[%s9 + $0x2c] sm:$0xf]
    %v995 = vld [vmem:[%s9 + $0x30] sm:$0xf]
    %v996 = vld [vmem:[%s9 + $0x34] sm:$0xf]
    %v997 = vld [vmem:[%s9 + $0x38] sm:$0xf]
    %v998 = vld [vmem:[%s9 + $0x3c] sm:$0xf]
    %v999 = vld [vmem:[%s9 + $0x40] sm:$0xf]
    %v1000 = vld [vmem:[%s9 + $0x44] sm:$0xf]
    %v1001 = vld [vmem:[%s9 + $0x48] sm:$0xf]
    %v1002 = vld [vmem:[%s9 + $0x4c] sm:$0xf]
    %v1003 = vld [vmem:[%s9 + $0x50] sm:$0xf]
    %v1004 = vld [vmem:[%s9 + $0x54] sm:$0xf]
    %v1005 = vld [vmem:[%s9 + $0x58] sm:$0xf]
    %v1006 = vld [vmem:[%s9 + $0x5c] sm:$0xf]
    %v1007 = vld [vmem:[%s9 + $0x60] sm:$0xf]
    %v1008 = vld [vmem:[%s9 + $0x64] sm:$0xf]
    %v1009 = vld [vmem:[%s9 + $0x68] sm:$0xf]
    %v1010 = vld [vmem:[%s9 + $0x6c] sm:$0xf]
    %v1011 = vld [vmem:[%s9 + $0x70] sm:$0xf]
    %v1012 = vld [vmem:[%s9 + $0x74] sm:$0xf]
    %v1013 = vld [vmem:[%s9 + $0x78] sm:$0xf]
    %v1014 = vld [vmem:[%s9 + $0x7c] sm:$0xf]
    %v1015 = vld [vmem:[%s10] sm:$0x1]
    %v1017 = vlaneseq
    %v1018 = vshrl.u32 %v1017, 7
    %v1019 = vsub.s32 0, %v1018
    %v1020 = vrot.slane %v1015, %v1019
    %v1054 = vunpack.c.l.b16 %v983
    %v1055 = vunpack.c.l.b16 %v984
    %v1056 = vunpack.c.l.b16 %v985
    %v1057 = vunpack.c.l.b16 %v986
    %v1058 = vunpack.c.l.b16 %v987
    %v1059 = vunpack.c.l.b16 %v988
    %v1060 = vunpack.c.l.b16 %v989
    %v1061 = vunpack.c.l.b16 %v990
    %v1062 = vunpack.c.l.b16 %v991
    %v1063 = vunpack.c.l.b16 %v992
    %v1064 = vunpack.c.l.b16 %v993
    %v1065 = vunpack.c.l.b16 %v994
    %v1066 = vunpack.c.l.b16 %v995
    %v1067 = vunpack.c.l.b16 %v996
    %v1068 = vunpack.c.l.b16 %v997
    %v1069 = vunpack.c.l.b16 %v998
    %v1070 = vunpack.c.l.b16 %v999
    %v1071 = vunpack.c.l.b16 %v1000
    %v1072 = vunpack.c.l.b16 %v1001
    %v1073 = vunpack.c.l.b16 %v1002
    %v1074 = vunpack.c.l.b16 %v1003
    %v1075 = vunpack.c.l.b16 %v1004
    %v1076 = vunpack.c.l.b16 %v1005
    %v1077 = vunpack.c.l.b16 %v1006
    %v1078 = vunpack.c.l.b16 %v1007
    %v1079 = vunpack.c.l.b16 %v1008
    %v1080 = vunpack.c.l.b16 %v1009
    %v1081 = vunpack.c.l.b16 %v1010
    %v1082 = vunpack.c.l.b16 %v1011
    %v1083 = vunpack.c.l.b16 %v1012
    %v1084 = vunpack.c.l.b16 %v1013
    %v1085 = vunpack.c.l.b16 %v1014
    %v1086 = vpack.c.b16 %v1055, %v1054
    %v1087 = vpack.c.b16 %v1057, %v1056
    %v1088 = vpack.c.b16 %v1059, %v1058
    %v1089 = vpack.c.b16 %v1061, %v1060
    %v1090 = vpack.c.b16 %v1063, %v1062
    %v1091 = vpack.c.b16 %v1065, %v1064
    %v1092 = vpack.c.b16 %v1067, %v1066
    %v1093 = vpack.c.b16 %v1069, %v1068
    %v1094 = vpack.c.b16 %v1071, %v1070
    %v1095 = vpack.c.b16 %v1073, %v1072
    %v1096 = vpack.c.b16 %v1075, %v1074
    %v1097 = vpack.c.b16 %v1077, %v1076
    %v1098 = vpack.c.b16 %v1079, %v1078
    %v1099 = vpack.c.b16 %v1081, %v1080
    %v1100 = vpack.c.b16 %v1083, %v1082
    %v1101 = vpack.c.b16 %v1085, %v1084
    %1118 = vmatprep.subr.bf16.mxu0 0
    %1119 = vmatpush1.bf16.msra.mxu0 %v1086
    %1120 = vmatprep.subr.bf16.mxu0 0
    %1121 = vmatpush1.bf16.msra.mxu0 %v1087
    %1122 = vmatprep.subr.bf16.mxu0 0
    %1123 = vmatpush1.bf16.msra.mxu0 %v1088
    %1124 = vmatprep.subr.bf16.mxu0 0
    %1125 = vmatpush1.bf16.msra.mxu0 %v1089
    %1126 = vmatprep.subr.bf16.mxu0 0
    %1127 = vmatpush1.bf16.msra.mxu0 %v1090
    %1128 = vmatprep.subr.bf16.mxu0 0
    %1129 = vmatpush1.bf16.msra.mxu0 %v1091
    %1130 = vmatprep.subr.bf16.mxu0 0
    %1131 = vmatpush1.bf16.msra.mxu0 %v1092
    %1132 = vmatprep.subr.bf16.mxu0 0
    %1133 = vmatpush1.bf16.msra.mxu0 %v1093
    %1134 = vmatprep.subr.bf16.mxu0 0
    %1135 = vmatpush1.bf16.msra.mxu0 %v1094
    %1136 = vmatprep.subr.bf16.mxu0 0
    %1137 = vmatpush1.bf16.msra.mxu0 %v1095
    %1138 = vmatprep.subr.bf16.mxu0 0
    %1139 = vmatpush1.bf16.msra.mxu0 %v1096
    %1140 = vmatprep.subr.bf16.mxu0 0
    %1141 = vmatpush1.bf16.msra.mxu0 %v1097
    %1142 = vmatprep.subr.bf16.mxu0 0
    %1143 = vmatpush1.bf16.msra.mxu0 %v1098
    %1144 = vmatprep.subr.bf16.mxu0 0
    %1145 = vmatpush1.bf16.msra.mxu0 %v1099
    %1146 = vmatprep.subr.bf16.mxu0 0
    %1147 = vmatpush1.bf16.msra.mxu0 %v1100
    %1148 = vmatprep.subr.bf16.mxu0 0
    %1149 = vmatpush1.bf16.msra.mxu0 %v1101
    %1150 = vmatprep.mubr.bf16.mxu0 %v982
    %1151 = vmatmul.mubr.bf16.gmra.mrb[0].mxu0 %v981
    %v1152 = vpop.f32.mrb[0].mxu0
    %v1153 = vadd.f32 %v1020, %v1152
    %v1154 = vpop.f32.mrb[0].mxu0
    %v1155 = vpop.f32.mrb[0].mxu0
    %v1156 = vpop.f32.mrb[0].mxu0
    %1157 = vdwg.mxu0
    %v1158 = vtanh.pop %v1153
    %1159 = vst [vmem:[#allocation19] sm:$0x3] %v1158
    %v1160 = vpack.c.bf16 %v1158, %v1158
    %v1161 = vld [vmem:[%s11] sm:$0xf]
    %v1162 = vld [vmem:[%s11 + $0x4] sm:$0xf]
    %v1163 = vld [vmem:[%s11 + $0x8] sm:$0xf]
    %v1164 = vld [vmem:[%s11 + $0xc] sm:$0xf]
    %v1165 = vld [vmem:[%s11 + $0x10] sm:$0xf]
    %v1166 = vld [vmem:[%s11 + $0x14] sm:$0xf]
    %v1167 = vld [vmem:[%s11 + $0x18] sm:$0xf]
    %v1168 = vld [vmem:[%s11 + $0x1c] sm:$0xf]
    %v1169 = vld [vmem:[%s11 + $0x20] sm:$0xf]
    %v1170 = vld [vmem:[%s11 + $0x24] sm:$0xf]
    %v1171 = vld [vmem:[%s11 + $0x28] sm:$0xf]
    %v1172 = vld [vmem:[%s11 + $0x2c] sm:$0xf]
    %v1173 = vld [vmem:[%s11 + $0x30] sm:$0xf]
    %v1174 = vld [vmem:[%s11 + $0x34] sm:$0xf]
    %v1175 = vld [vmem:[%s11 + $0x38] sm:$0xf]
    %v1176 = vld [vmem:[%s11 + $0x3c] sm:$0xf]
    %v1177 = vld [vmem:[#allocation17] sm:$0x1]
    %v1179 = vlaneseq
    %v1180 = vshrl.u32 %v1179, 7
    %v1181 = vsub.s32 0, %v1180
    %v1182 = vrot.slane %v1177, %v1181
    %v1200 = vunpack.c.l.b16 %v1161
    %v1201 = vunpack.c.l.b16 %v1162
    %v1202 = vunpack.c.l.b16 %v1163
    %v1203 = vunpack.c.l.b16 %v1164
    %v1204 = vunpack.c.l.b16 %v1165
    %v1205 = vunpack.c.l.b16 %v1166
    %v1206 = vunpack.c.l.b16 %v1167
    %v1207 = vunpack.c.l.b16 %v1168
    %v1208 = vunpack.c.l.b16 %v1169
    %v1209 = vunpack.c.l.b16 %v1170
    %v1210 = vunpack.c.l.b16 %v1171
    %v1211 = vunpack.c.l.b16 %v1172
    %v1212 = vunpack.c.l.b16 %v1173
    %v1213 = vunpack.c.l.b16 %v1174
    %v1214 = vunpack.c.l.b16 %v1175
    %v1215 = vunpack.c.l.b16 %v1176
    %v1216 = vpack.c.b16 %v1201, %v1200
    %v1217 = vpack.c.b16 %v1203, %v1202
    %v1218 = vpack.c.b16 %v1205, %v1204
    %v1219 = vpack.c.b16 %v1207, %v1206
    %v1220 = vpack.c.b16 %v1209, %v1208
    %v1221 = vpack.c.b16 %v1211, %v1210
    %v1222 = vpack.c.b16 %v1213, %v1212
    %v1223 = vpack.c.b16 %v1215, %v1214
    %1232 = vmatprep.subr.bf16.mxu0 0
    %1233 = vmatpush1.bf16.msra.mxu0 %v1216
    %1234 = vmatprep.subr.bf16.mxu0 0
    %1235 = vmatpush1.bf16.msra.mxu0 %v1217
    %1236 = vmatprep.subr.bf16.mxu0 0
    %1237 = vmatpush1.bf16.msra.mxu0 %v1218
    %1238 = vmatprep.subr.bf16.mxu0 0
    %1239 = vmatpush1.bf16.msra.mxu0 %v1219
    %1240 = vmatprep.subr.bf16.mxu0 0
    %1241 = vmatpush1.bf16.msra.mxu0 %v1220
    %1242 = vmatprep.subr.bf16.mxu0 0
    %1243 = vmatpush1.bf16.msra.mxu0 %v1221
    %1244 = vmatprep.subr.bf16.mxu0 0
    %1245 = vmatpush1.bf16.msra.mxu0 %v1222
    %1246 = vmatprep.subr.bf16.mxu0 0
    %1247 = vmatpush1.bf16.msra.mxu0 %v1223
    %1248 = vmatprep.subr.bf16.mxu0 0
    %1249 = vmatpush1.bf16.msra.mxu0 0
    %1250 = vmatprep.subr.bf16.mxu0 0
    %1251 = vmatpush1.bf16.msra.mxu0 0
    %1252 = vmatprep.subr.bf16.mxu0 0
    %1253 = vmatpush1.bf16.msra.mxu0 0
    %1254 = vmatprep.subr.bf16.mxu0 0
    %1255 = vmatpush1.bf16.msra.mxu0 0
    %1256 = vmatprep.subr.bf16.mxu0 0
    %1257 = vmatpush1.bf16.msra.mxu0 0
    %1258 = vmatprep.subr.bf16.mxu0 0
    %1259 = vmatpush1.bf16.msra.mxu0 0
    %1260 = vmatprep.subr.bf16.mxu0 0
    %1261 = vmatpush1.bf16.msra.mxu0 0
    %1262 = vmatprep.subr.bf16.mxu0 0
    %1263 = vmatpush1.bf16.msra.mxu0 0
    %1264 = vmatprep.mubr.bf16.mxu0 0
    %1265 = vmatmul.mubr.bf16.gmra.mrb[0].mxu0 %v1160
    %v1266 = vpop.f32.mrb[0].mxu0
    %v1267 = vadd.f32 %v1182, %v1266
    %v1268 = vpop.f32.mrb[0].mxu0
    %v1269 = vpop.f32.mrb[0].mxu0
    %v1270 = vpop.f32.mrb[0].mxu0
    %1271 = vdwg.mxu0
    %v1272 = vmax.f32 %v1267, 0.0
    %v1273 = vpack.c.bf16 %v1272, %v1272
    %v1274 = vld [vmem:[%s13] sm:$0xf]
    %v1275 = vld [vmem:[%s13 + $0x4] sm:$0xf]
    %v1276 = vld [vmem:[%s13 + $0x8] sm:$0xf]
    %v1277 = vld [vmem:[%s13 + $0xc] sm:$0xf]
    %v1278 = vld [vmem:[%s13 + $0x10] sm:$0xf]
    %v1279 = vld [vmem:[%s13 + $0x14] sm:$0xf]
    %v1280 = vld [vmem:[%s13 + $0x18] sm:$0xf]
    %v1281 = vld [vmem:[%s13 + $0x1c] sm:$0xf]
    %v1282 = vld [vmem:[%s14] sm:$0x1]
    %v1284 = vlaneseq
    %v1285 = vshrl.u32 %v1284, 7
    %v1286 = vsub.s32 0, %v1285
    %v1287 = vrot.slane %v1282, %v1286
    %v1297 = vunpack.c.l.b16 %v1274
    %v1298 = vunpack.c.l.b16 %v1275
    %v1299 = vunpack.c.l.b16 %v1276
    %v1300 = vunpack.c.l.b16 %v1277
    %v1301 = vunpack.c.l.b16 %v1278
    %v1302 = vunpack.c.l.b16 %v1279
    %v1303 = vunpack.c.l.b16 %v1280
    %v1304 = vunpack.c.l.b16 %v1281
    %v1305 = vpack.c.b16 %v1298, %v1297
    %v1306 = vpack.c.b16 %v1300, %v1299
    %v1307 = vpack.c.b16 %v1302, %v1301
    %v1308 = vpack.c.b16 %v1304, %v1303
    %v1314 = vsel %vm728, %v1273, 0
    %1316 = vmatprep.subr.bf16.mxu0 0
    %1317 = vmatpush1.bf16.msra.mxu0 %v1305
    %1318 = vmatprep.subr.bf16.mxu0 0
    %1319 = vmatpush1.bf16.msra.mxu0 %v1306
    %1320 = vmatprep.subr.bf16.mxu0 0
    %1321 = vmatpush1.bf16.msra.mxu0 %v1307
    %1322 = vmatprep.subr.bf16.mxu0 0
    %1323 = vmatpush1.bf16.msra.mxu0 %v1308
    %1324 = vmatprep.subr.bf16.mxu0 0
    %1325 = vmatpush1.bf16.msra.mxu0 0
    %1326 = vmatprep.subr.bf16.mxu0 0
    %1327 = vmatpush1.bf16.msra.mxu0 0
    %1328 = vmatprep.subr.bf16.mxu0 0
    %1329 = vmatpush1.bf16.msra.mxu0 0
    %1330 = vmatprep.subr.bf16.mxu0 0
    %1331 = vmatpush1.bf16.msra.mxu0 0
    %1332 = vmatprep.subr.bf16.mxu0 0
    %1333 = vmatpush1.bf16.msra.mxu0 0
    %1334 = vmatprep.subr.bf16.mxu0 0
    %1335 = vmatpush1.bf16.msra.mxu0 0
    %1336 = vmatprep.subr.bf16.mxu0 0
    %1337 = vmatpush1.bf16.msra.mxu0 0
    %1338 = vmatprep.subr.bf16.mxu0 0
    %1339 = vmatpush1.bf16.msra.mxu0 0
    %1340 = vmatprep.subr.bf16.mxu0 0
    %1341 = vmatpush1.bf16.msra.mxu0 0
    %1342 = vmatprep.subr.bf16.mxu0 0
    %1343 = vmatpush1.bf16.msra.mxu0 0
    %1344 = vmatprep.subr.bf16.mxu0 0
    %1345 = vmatpush1.bf16.msra.mxu0 0
    %1346 = vmatprep.subr.bf16.mxu0 0
    %1347 = vmatpush1.bf16.msra.mxu0 0
    %1348 = vmatprep.mubr.bf16.mxu0 0
    %1349 = vmatmul.mubr.bf16.gmra.mrb[0].mxu0 %v1314
    %v1350 = vpop.f32.mrb[0].mxu0
    %v1351 = vadd.f32 %v1287, %v1350
    %v1352 = vpop.f32.mrb[0].mxu0
    %v1353 = vpop.f32.mrb[0].mxu0
    %v1354 = vpop.f32.mrb[0].mxu0
    %1355 = vdwg.mxu0
    %v1356 = vmax.f32 %v1351, 0.0
    %v1357 = vpack.c.bf16 %v1356, %v1356
    %v1358 = vld [vmem:[%s15] sm:$0xf]
    %v1359 = vld [vmem:[%s15 + $0x4] sm:$0xf]
    %v1360 = vld [vmem:[%s15 + $0x8] sm:$0xf]
    %v1361 = vld [vmem:[%s15 + $0xc] sm:$0xf]
    %v1362 = vld [vmem:[%s16] sm:$0x1]
    %v1364 = vlaneseq
    %v1365 = vshrl.u32 %v1364, 7
    %v1366 = vsub.s32 0, %v1365
    %v1367 = vrot.slane %v1362, %v1366
    %v1373 = vunpack.c.l.b16 %v1358
    %v1374 = vunpack.c.l.b16 %v1359
    %v1375 = vunpack.c.l.b16 %v1360
    %v1376 = vunpack.c.l.b16 %v1361
    %v1377 = vpack.c.b16 %v1374, %v1373
    %v1378 = vpack.c.b16 %v1376, %v1375
    %vm1381 = vcmask 261120
    %v1383 = vsel %vm1381, %v1357, 0
    %1385 = vmatprep.subr.bf16.mxu0 0
    %1386 = vmatpush1.bf16.msra.mxu0 %v1377
    %1387 = vmatprep.subr.bf16.mxu0 0
    %1388 = vmatpush1.bf16.msra.mxu0 %v1378
    %1389 = vmatprep.subr.bf16.mxu0 0
    %1390 = vmatpush1.bf16.msra.mxu0 0
    %1391 = vmatprep.subr.bf16.mxu0 0
    %1392 = vmatpush1.bf16.msra.mxu0 0
    %1393 = vmatprep.subr.bf16.mxu0 0
    %1394 = vmatpush1.bf16.msra.mxu0 0
    %1395 = vmatprep.subr.bf16.mxu0 0
    %1396 = vmatpush1.bf16.msra.mxu0 0
    %1397 = vmatprep.subr.bf16.mxu0 0
    %1398 = vmatpush1.bf16.msra.mxu0 0
    %1399 = vmatprep.subr.bf16.mxu0 0
    %1400 = vmatpush1.bf16.msra.mxu0 0
    %1401 = vmatprep.subr.bf16.mxu0 0
    %1402 = vmatpush1.bf16.msra.mxu0 0
    %1403 = vmatprep.subr.bf16.mxu0 0
    %1404 = vmatpush1.bf16.msra.mxu0 0
    %1405 = vmatprep.subr.bf16.mxu0 0
    %1406 = vmatpush1.bf16.msra.mxu0 0
    %1407 = vmatprep.subr.bf16.mxu0 0
    %1408 = vmatpush1.bf16.msra.mxu0 0
    %1409 = vmatprep.subr.bf16.mxu0 0
    %1410 = vmatpush1.bf16.msra.mxu0 0
    %1411 = vmatprep.subr.bf16.mxu0 0
    %1412 = vmatpush1.bf16.msra.mxu0 0
    %1413 = vmatprep.subr.bf16.mxu0 0
    %1414 = vmatpush1.bf16.msra.mxu0 0
    %1415 = vmatprep.subr.bf16.mxu0 0
    %1416 = vmatpush1.bf16.msra.mxu0 0
    %1417 = vmatprep.mubr.bf16.mxu0 0
    %1418 = vmatmul.mubr.bf16.gmra.mrb[0].mxu0 %v1383
    %v1419 = vpop.f32.mrb[0].mxu0
    %v1420 = vadd.f32 %v1367, %v1419
    %v1421 = vpop.f32.mrb[0].mxu0
    %v1422 = vpop.f32.mrb[0].mxu0
    %v1423 = vpop.f32.mrb[0].mxu0
    %1424 = vdwg.mxu0
    %v1425 = vpack.c.bf16 %v1420, %v1420
    %1426 = vst [vmem:[#allocation20] sm:$0x1] %v1425
    // Predicated region
    $region110: #{tpu_custom_call.1} parent=1 // pred_check
      _
    $region111: #{tpu_custom_call.1} parent=1 // pred_check_branch
      %1428 = sbr.rel (0) target = $region113
    $region112: #{tpu_custom_call.1} parent=1 // pred_region
      %s1430 = ssub.s32 32, 32
      %1431 = vsyncadd [#allocation4], %s1430
      %s1433 = sshll.u32 [#allocation19], 4
      %s1434 = int_to_ptr.vmem [resolvable:$true] %s1433
      %1436 = dma.vmem_to_hbm [thread:$0]  %s1434, 32, %s17, [#allocation4]
    $region113: #{tpu_custom_call.1} parent=1 // pred_fallthru
      _
    // Predicated region
    $region114: #{tpu_custom_call.1} parent=1 // pred_check
      _
    $region115: #{tpu_custom_call.1} parent=1 // pred_check_branch
      %1438 = sbr.rel (0) target = $region117
    $region116: #{tpu_custom_call.1} parent=1 // pred_region
      %s1440 = ssub.s32 16, 16
      %1441 = vsyncadd [#allocation21], %s1440
      %s1443 = sshll.u32 [#allocation20], 4
      %s1444 = int_to_ptr.vmem [resolvable:$true] %s1443
      %1446 = dma.vmem_to_hbm [thread:$0]  %s1444, 16, %s18, [#allocation21]
    $region117: #{tpu_custom_call.1} parent=1 // pred_fallthru
      _
    // Predicated region
    $region118: #{tpu_custom_call.1} parent=1 // pred_check
      _
    $region119: #{tpu_custom_call.1} parent=1 // pred_check_branch
      %1448 = sbr.rel (0) target = $region121
    $region120: #{tpu_custom_call.1} parent=1 // pred_region
      %1449 = dma.done [#allocation4], 32
    $region121: #{tpu_custom_call.1} parent=1 // pred_fallthru
      _
    // Predicated region
    $region122: #{tpu_custom_call.1} parent=1 // pred_check
      _
    $region123: #{tpu_custom_call.1} parent=1 // pred_check_branch
      %1451 = sbr.rel (0) target = $region125
    $region124: #{tpu_custom_call.1} parent=1 // pred_region
      %1452 = dma.done [#allocation21], 16
    $region125: #{tpu_custom_call.1} parent=1 // pred_fallthru
      _
    %1453 = vsyncpa [#allocation3], 1
    %1454 = vsyncpa [#allocation6], 1
    %1455 = vsyncpa [#allocation9], 1
    %1456 = vsyncpa [#allocation12], 1
    %1457 = vsyncpa [#allocation15], 1
    %1458 = vsyncpa [#allocation18], 1
    %1459 = vsyncpa [#allocation4], 1
    %1460 = vsyncpa [#allocation21], 1

</llo_original>
